<compile_context>
chip_gen: v6e
topology: v6e:2x2x1
jax: 0.10.0
libtpu: 0.0.40
codegen_flags: <defaults>
</compile_context>

<pallas_src>
import functools

import jax
import jax.numpy as jnp
from jax.experimental import pallas as pl
from jax.experimental.pallas import tpu as pltpu

C = 31  # fixed by the module: Conv1d(31, 31, ...)


def _fused_kernel(stack_ref, w_ref, sel_ref, o_ref, *, P, n_cols):
    """All branches for BB batch elements.

    stack_ref: (K, BB*L)        im2col tap stack + ones row (bf16/f32)
    w_ref:     (C_total, K)     fused conv taps (BN scale folded) + shift column
    sel_ref:   (BB*L, BB*Lout)  0/1 compaction matrix (picks col b*L + j*P)
    o_ref:     (C_total, BB*Lout)
    """
    # Conv + bias + BN (all folded into w/stack) for every branch: one deep-K dot.
    acc = jnp.dot(w_ref[...], stack_ref[...],
                  preferred_element_type=jnp.float32)          # (C_total, BB*L) f32
    y = jnp.maximum(acc, 0.0)                                  # ReLU (commutes w/ max)
    # Window max on XLU/VPU: wmax[:, c] = max_{p<P} y[:, c+p] (wrap never selected).
    wmax = y
    for p in range(1, P):
        wmax = jnp.maximum(wmax, pltpu.roll(y, shift=n_cols - p, axis=1))
    # Compact the strided window starts (b*L + j*P) into contiguous lanes on the MXU.
    o_ref[...] = jnp.dot(wmax, sel_ref[...],
                         preferred_element_type=jnp.float32).astype(o_ref.dtype)


def parallel_cnn_forward(x, branch_params, *, pool_kernel, eps=1e-5,
                         block_batch=None, use_bf16=True):
    """Equivalent of ParallelCNN.forward (eval mode).

    x: (B, 31, L) f32.  branch_params: list of dicts with keys
    w (31,31,k), b, gamma, beta, running_mean, running_var, k.
    Returns (B, 31*len(branch_params), L // pool_kernel) f32.
    """
    B, Cin, L = x.shape
    assert Cin == C
    P = pool_kernel
    Lout = L // P
    n_br = len(branch_params)
    C_total = n_br * C
    c_pad = ((C + 7) // 8) * 8          # 31 -> 32 sublanes

    # Batch-block: big enough for a >=128-lane output slab and MXU N >= 256.
    if block_batch is None:
        block_batch = max(pl.cdiv(128, max(Lout, 1)), pl.cdiv(256, L), 1)
    BB = block_batch
    B_pad = pl.cdiv(B, BB) * BB
    G = B_pad // BB

    # One shared 'same' padding wide enough for every branch.
    pad_l = max((p["k"] - 1) // 2 for p in branch_params)
    pad_r = max((p["k"] - 1) - (p["k"] - 1) // 2 for p in branch_params)
    s_taps = pad_l + pad_r + 1
    K = s_taps * c_pad + 1              # +1: ones row carrying the folded shift

    # im2col tap stack precomputed in the wrapper (frees kernel load/VALU slots):
    # stack[s*c_pad + ci, b*L + l] = x_pad[b, ci, s + l].
    x_pad = jnp.pad(x, ((0, B_pad - B), (0, c_pad - C), (pad_l, pad_r)))
    shifted = jnp.stack([x_pad[:, :, s:s + L] for s in range(s_taps)], axis=0)
    stack = jnp.transpose(shifted, (0, 2, 1, 3)).reshape(s_taps * c_pad, B_pad * L)
    stack_aug = jnp.concatenate(
        [stack, jnp.ones((1, B_pad * L), jnp.float32)], axis=0)           # (K, B_pad*L)

    # Fused weights: BN scale folded into taps; conv-bias + BN shift as last column.
    w_rows, shifts = [], []
    for prm in branch_params:
        k = prm["k"]
        inv_std = 1.0 / jnp.sqrt(prm["running_var"].astype(jnp.float32) + eps)
        scale = (prm["gamma"] * inv_std).astype(jnp.float32)               # (C,)
        shifts.append(((prm["b"] - prm["running_mean"]) * scale + prm["beta"])
                      .astype(jnp.float32))
        off = pad_l - (k - 1) // 2                    # branch tap offset in the stack
        w_scaled = scale[:, None, None] * prm["w"].astype(jnp.float32)     # (Co,Ci,k)
        wb = jnp.zeros((C, s_taps, c_pad), jnp.float32)
        wb = wb.at[:, off:off + k, :C].set(jnp.transpose(w_scaled, (0, 2, 1)))
        w_rows.append(wb.reshape(C, s_taps * c_pad))
    w_aug = jnp.concatenate(
        [jnp.concatenate(w_rows, axis=0),
         jnp.concatenate(shifts).reshape(C_total, 1)], axis=1)             # (C_total, K)

    # 0/1 compaction: output col c = b_local*Lout + j reads row b_local*L + j*P.
    cols = jnp.arange(BB * Lout)
    src = (cols // Lout) * L + (cols % Lout) * P
    sel = (jnp.arange(BB * L)[:, None] == src[None, :]).astype(jnp.float32)

    mm_dtype = jnp.bfloat16 if use_bf16 else jnp.float32
    stack_aug = stack_aug.astype(mm_dtype)
    w_aug = w_aug.astype(mm_dtype)

    kernel = functools.partial(_fused_kernel, P=P, n_cols=BB * L)
    cost = pl.CostEstimate(
        flops=2 * C_total * K * B_pad * L + 2 * C_total * BB * L * B_pad * Lout,
        transcendentals=0,
        bytes_accessed=int(stack_aug.size * stack_aug.dtype.itemsize
                           + w_aug.size * w_aug.dtype.itemsize
                           + sel.size * 4 + C_total * B_pad * Lout * 4))

    out_flat = pl.pallas_call(
        kernel,
        out_shape=jax.ShapeDtypeStruct((C_total, B_pad * Lout), jnp.float32),
        grid=(G,),
        in_specs=[
            pl.BlockSpec((K, BB * L), lambda i: (0, i)),
            pl.BlockSpec((C_total, K), lambda i: (0, 0)),
            pl.BlockSpec((BB * L, BB * Lout), lambda i: (0, 0)),
        ],
        out_specs=pl.BlockSpec((C_total, BB * Lout), lambda i: (0, i)),
        compiler_params=pltpu.CompilerParams(dimension_semantics=("parallel",)),
        cost_estimate=cost,
    )(stack_aug, w_aug, sel)

    # Layout plumbing back to (B, C_total, Lout).
    out = out_flat.reshape(C_total, B_pad, Lout).transpose(1, 0, 2)
    return out[:B]


# ----------------------- pure-JAX reference (for verification) -----------------------
def _ref_branch(x, w, b, gamma, beta, running_mean, running_var, *, k, pool_kernel,
                eps=1e-5):
    pad_left = (k - 1) // 2
    pad_right = (k - 1) - pad_left
    y = jax.lax.conv_general_dilated(
        x, w, window_strides=(1,), padding=[(pad_left, pad_right)],
        dimension_numbers=("NCH", "OIH", "NCH"))
    y = y + b[None, :, None]
    y = gamma[None, :, None] * (y - running_mean[None, :, None]) / jnp.sqrt(
        running_var[None, :, None] + eps) + beta[None, :, None]
    y = jnp.maximum(y, 0.0)
    B, Cc, L = y.shape
    Lout = L // pool_kernel
    return y[:, :, : Lout * pool_kernel].reshape(B, Cc, Lout, pool_kernel).max(axis=-1)


def _ref_forward(x, branch_params, *, pool_kernel):
    return jnp.concatenate(
        [_ref_branch(x, **p, pool_kernel=pool_kernel) for p in branch_params], axis=1)


# --------------------------------------- main ---------------------------------------
if __name__ == "__main__":
    para_ker = [3, 5, 7]
    pool_kernel = 6
    B, L = 16, 96  # batched so each grid step emits a 128-lane output slab (2 steps)

    key = jax.random.PRNGKey(0)
    key, kx = jax.random.split(key)
    x = jax.random.normal(kx, (B, C, L), dtype=jnp.float32)

    branch_params = []
    for k_sz in para_ker:
        key, kw, kb, kg, kbeta, kv = jax.random.split(key, 6)
        branch_params.append(dict(
            w=jax.random.normal(kw, (C, C, k_sz), dtype=jnp.float32) * 0.1,
            b=jax.random.normal(kb, (C,), dtype=jnp.float32) * 0.1,
            gamma=1.0 + 0.1 * jax.random.normal(kg, (C,), dtype=jnp.float32),
            beta=0.1 * jax.random.normal(kbeta, (C,), dtype=jnp.float32),
            running_mean=jnp.zeros((C,), dtype=jnp.float32),
            running_var=1.0 + 0.5 * jax.random.uniform(kv, (C,), dtype=jnp.float32),
            k=k_sz,
        ))

    ref = jax.block_until_ready(_ref_forward(x, branch_params, pool_kernel=pool_kernel))
    expected_shape = (B, C * len(para_ker), L // pool_kernel)

    # Default (bf16 matmul operands, f32 accumulation) -> relaxed tolerance.
    out = jax.block_until_ready(
        parallel_cnn_forward(x, branch_params, pool_kernel=pool_kernel))
    assert out.shape == expected_shape, (out.shape, expected_shape)
    assert jnp.allclose(out, ref, rtol=2e-2, atol=2e-2), float(jnp.max(jnp.abs(out - ref)))

    # f32 path keeps the tight reference check.
    out_f32 = jax.block_until_ready(
        parallel_cnn_forward(x, branch_params, pool_kernel=pool_kernel, use_bf16=False))
    assert out_f32.shape == expected_shape, (out_f32.shape, expected_shape)
    assert jnp.allclose(out_f32, ref, rtol=1e-3, atol=1e-3), \
        float(jnp.max(jnp.abs(out_f32 - ref)))

    print("KERNEL_OK")
</pallas_src>

<mosaic_0001>
module attributes {stable_mosaic.version = 11 : i64} {
  func.func @_fused_kernel(%arg0: i32, %arg1: memref<225x768xbf16, #tpu.memory_space<vmem>>, %arg2: memref<93x225xbf16, #tpu.memory_space<vmem>>, %arg3: memref<768x128xf32, #tpu.memory_space<vmem>>, %arg4: memref<93x128xf32, #tpu.memory_space<vmem>>) attributes {dimension_semantics = [#tpu.dimension_semantics<parallel>], iteration_bounds = array<i64: 2>, scalar_prefetch = 0 : i64, scratch_operands = 0 : i64, tpu.core_type = #tpu.core_type<tc>, window_params = [{transform_indices = @transform_0, window_bounds = array<i64: 225, 768>}, {pipeline_mode = #tpu.pipeline_mode<synchronous>, transform_indices = @transform_1, window_bounds = array<i64: 93, 225>}, {pipeline_mode = #tpu.pipeline_mode<synchronous>, transform_indices = @transform_2, window_bounds = array<i64: 768, 128>}, {transform_indices = @transform_3, window_bounds = array<i64: 93, 128>}]} {
    %c0 = arith.constant 0 : index
    %c0_0 = arith.constant 0 : index
    %0 = vector.load %arg2[%c0, %c0_0] : memref<93x225xbf16, #tpu.memory_space<vmem>>, vector<93x225xbf16>
    %c0_1 = arith.constant 0 : index
    %c0_2 = arith.constant 0 : index
    %1 = vector.load %arg1[%c0_1, %c0_2] : memref<225x768xbf16, #tpu.memory_space<vmem>>, vector<225x768xbf16>
    %cst = arith.constant dense<0.000000e+00> : vector<93x768xf32>
    %2 = tpu.matmul %0, %1, %cst {dimension_numbers = #tpu.dot_dimension_numbers<[1], [0], [0], [1], [0, 0, 1, 1], [], []>} : vector<93x225xbf16>, vector<225x768xbf16>, vector<93x768xf32> -> vector<93x768xf32>
    %cst_3 = arith.constant 0.000000e+00 : f32
    %3 = vector.broadcast %cst_3 : f32 to vector<93x768xf32>
    %4 = arith.maximumf %2, %3 : vector<93x768xf32>
    %c767_i32 = arith.constant 767 : i32
    %5 = tpu.dynamic_rotate %4 by %c767_i32 dim 1 : vector<93x768xf32>, i32 -> vector<93x768xf32>
    %6 = arith.maximumf %4, %5 : vector<93x768xf32>
    %c766_i32 = arith.constant 766 : i32
    %7 = tpu.dynamic_rotate %4 by %c766_i32 dim 1 : vector<93x768xf32>, i32 -> vector<93x768xf32>
    %8 = arith.maximumf %6, %7 : vector<93x768xf32>
    %c765_i32 = arith.constant 765 : i32
    %9 = tpu.dynamic_rotate %4 by %c765_i32 dim 1 : vector<93x768xf32>, i32 -> vector<93x768xf32>
    %10 = arith.maximumf %8, %9 : vector<93x768xf32>
    %c764_i32 = arith.constant 764 : i32
    %11 = tpu.dynamic_rotate %4 by %c764_i32 dim 1 : vector<93x768xf32>, i32 -> vector<93x768xf32>
    %12 = arith.maximumf %10, %11 : vector<93x768xf32>
    %c763_i32 = arith.constant 763 : i32
    %13 = tpu.dynamic_rotate %4 by %c763_i32 dim 1 : vector<93x768xf32>, i32 -> vector<93x768xf32>
    %14 = arith.maximumf %12, %13 : vector<93x768xf32>
    %c0_4 = arith.constant 0 : index
    %c0_5 = arith.constant 0 : index
    %15 = vector.load %arg3[%c0_4, %c0_5] : memref<768x128xf32, #tpu.memory_space<vmem>>, vector<768x128xf32>
    %cst_6 = arith.constant dense<0.000000e+00> : vector<93x128xf32>
    %16 = tpu.matmul %14, %15, %cst_6 {dimension_numbers = #tpu.dot_dimension_numbers<[1], [0], [0], [1], [0, 0, 1, 1], [], []>} : vector<93x768xf32>, vector<768x128xf32>, vector<93x128xf32> -> vector<93x128xf32>
    %c0_7 = arith.constant 0 : index
    %c0_8 = arith.constant 0 : index
    %17 = vector.load %arg4[%c0_7, %c0_8] : memref<93x128xf32, #tpu.memory_space<vmem>>, vector<93x128xf32>
    tpu.vector_store %arg4[%c0_7, %c0_8], %16 {strides = array<i32>} : memref<93x128xf32, #tpu.memory_space<vmem>>, vector<93x128xf32>,
    return
  }
  func.func @transform_0(%arg0: i32) -> (i32, i32) {
    %c0_i32 = arith.constant 0 : i32
    %c0_i32_0 = arith.constant 0 : i32
    return %c0_i32, %arg0 : i32, i32
  }
  func.func @transform_1(%arg0: i32) -> (i32, i32) {
    %c0_i32 = arith.constant 0 : i32
    %c0_i32_0 = arith.constant 0 : i32
    %c0_i32_1 = arith.constant 0 : i32
    return %c0_i32, %c0_i32_0 : i32, i32
  }
  func.func @transform_2(%arg0: i32) -> (i32, i32) {
    %c0_i32 = arith.constant 0 : i32
    %c0_i32_0 = arith.constant 0 : i32
    %c0_i32_1 = arith.constant 0 : i32
    return %c0_i32, %c0_i32_0 : i32, i32
  }
  func.func @transform_3(%arg0: i32) -> (i32, i32) {
    %c0_i32 = arith.constant 0 : i32
    %c0_i32_0 = arith.constant 0 : i32
    return %c0_i32, %arg0 : i32, i32
  }
}

</mosaic_0001>

<llo_original>
// kernel: tpu_custom_call.1
$region0: #{tpu_custom_call.1}
  #allocation0 [shape = 'u32[]', space=smem, size = 0x4, offset = 0x4, fixed_abs, tag = 'smem constant byte address 0x4 - core index']
  #allocation1 [shape = 'u32[144,128]{1,0:T(1,128)}', space=vmem, size = 0x12000, scoped, tag = 'internal scratch']
  %s0 = inlined_call_operand.hbm [shape: bf16[225,1536], index: 0, kind: input, shape index: {}]
  %s1 = inlined_call_operand.hbm [shape: bf16[93,225], index: 1, kind: input, shape index: {}]
  %s2 = inlined_call_operand.hbm [shape: f32[768,128], index: 2, kind: input, shape index: {}]
  %s3 = inlined_call_operand.hbm [shape: f32[93,256], index: 3, kind: output, shape index: {}]
  %s4 = sld [smem:[#allocation0]]
  $region57: #{tpu_custom_call.1} parent=0
    _
  %s6 = ssub.s32 1, %s4
  %s7 = scalar_select 0, %s6, %s4
  $region1: #{tpu_custom_call.1} parent=0
    #allocation2 [shape = 'u8[712704]{0}', space=vmem, size = 0xae000, scoped, tag = 'input window, operand 0']
    #allocation3 [shape = 's32[2]{0}', space=sflag, size = 0x8, scoped, tag = 'scoped memory for tpu_custom_call.1']
    #allocation4 [shape = 's32[2]{0}', space=sflag, size = 0x8, scoped, tag = 'scoped memory for tpu_custom_call.1']
    #allocation5 [shape = 'u8[49152]{0}', space=vmem, size = 0xc000, scoped, tag = 'input window, operand 1, single buffered']
    #allocation6 [shape = 's32[1]{0}', space=sflag, size = 0x4, scoped, tag = 'scoped memory for tpu_custom_call.1']
    #allocation7 [shape = 'u8[393216]{0}', space=vmem, size = 0x60000, scoped, tag = 'input window, operand 2, single buffered']
    #allocation8 [shape = 'u8[98304]{0}', space=vmem, size = 0x18000, scoped, tag = 'output window, operand 0']
    %8 = vsyncpa [#allocation3], 0
    %s9 = scalar_lea.sflag [#allocation3], 1
    %10 = vsyncpa %s9, 0
    %11 = vsyncpa [#allocation6], 0
    %12 = vsyncpa [#allocation4], 0
    %s13 = scalar_lea.sflag [#allocation4], 1
    %14 = vsyncpa %s13, 0
    loop: start=0, step=1, limit=4
    $region2: #{tpu_custom_call.1} parent=1 // loop_pre_header
      _
    $region3: #{tpu_custom_call.1} parent=1 // loop_header
      %s16 = sphi 0, %s20
      %p17 = scmp.ge.s32.totalorder %s16, 4
      %s26 = sphi 0, %s28
      %s29 = sphi 0, %s26
      %s30 = sphi 0, %s29
      %s46 = sphi 0, %s30
      %s50 = sphi 0, %s50
      %s52 = sphi 0, %s50
      %s53 = sphi 0, %s52
      %s67 = sphi 0, %s53
      %s71 = sphi 0, %s71
      %s73 = sphi 0, %s71
      %s74 = sphi 0, %s73
      %s88 = sphi 0, %s74
      %s94 = sphi 0, %s96
      %s97 = sphi 0, %s94
      %s98 = sphi 0, %s97
      %s114 = sphi 0, %s98
    $region4: #{tpu_custom_call.1} parent=1 // loop_header_branch
      %19 = sbr.rel (%p17) target = $region8
    $region5: #{tpu_custom_call.1} parent=1 // loop_body
      %s21 = ssub.s32 %s16, 1
      %s22 = ssub.s32 %s16, 2
      %s23 = sadd.s32 %s16, 1
      %s24 = ssub.s32 %s16, %s23
      %p25 = scmp.eq.s32.totalorder %s24, 0
      %s27 = sadd.s32 %s26, 1
      %s28 = scalar_select %p25, %s26, %s27
      %p31 = pneg %p25
      %p32 = scmp.eq.s32.totalorder %s16, 1
      %p33 = por %p31, %p32
      %p34 = scmp.ne.s32.totalorder %s26, %s29
      %p35 = scmp.eq.s32.totalorder %s16, 0
      %p36 = por %p34, %p35
      %p37 = scmp.ne.s32.totalorder %s26, %s29
      %p38 = scmp.eq.s32.totalorder %s21, 1
      %p39 = por %p37, %p38
      %p40 = scmp.ne.s32.totalorder %s29, %s30
      %p41 = scmp.eq.s32.totalorder %s21, 0
      %p42 = por %p40, %p41
      %p43 = scmp.ne.s32.totalorder %s29, %s30
      %p44 = scmp.eq.s32.totalorder %s22, 1
      %p45 = por %p43, %p44
      %p47 = scmp.ne.s32.totalorder %s30, %s46
      %p48 = scmp.eq.s32.totalorder %s22, 0
      %p49 = por %p47, %p48
      %s51 = sadd.s32 %s50, 1
      %p54 = scmp.eq.s32.totalorder %s16, 1
      %p55 = scmp.ne.s32.totalorder %s50, %s52
      %p56 = scmp.eq.s32.totalorder %s16, 0
      %p57 = por %p55, %p56
      %p58 = scmp.ne.s32.totalorder %s50, %s52
      %p59 = scmp.eq.s32.totalorder %s21, 1
      %p60 = por %p58, %p59
      %p61 = scmp.ne.s32.totalorder %s52, %s53
      %p62 = scmp.eq.s32.totalorder %s21, 0
      %p63 = por %p61, %p62
      %p64 = scmp.ne.s32.totalorder %s52, %s53
      %p65 = scmp.eq.s32.totalorder %s22, 1
      %p66 = por %p64, %p65
      %p68 = scmp.ne.s32.totalorder %s53, %s67
      %p69 = scmp.eq.s32.totalorder %s22, 0
      %p70 = por %p68, %p69
      %s72 = sadd.s32 %s71, 1
      %p75 = scmp.eq.s32.totalorder %s16, 1
      %p76 = scmp.ne.s32.totalorder %s71, %s73
      %p77 = scmp.eq.s32.totalorder %s16, 0
      %p78 = por %p76, %p77
      %p79 = scmp.ne.s32.totalorder %s71, %s73
      %p80 = scmp.eq.s32.totalorder %s21, 1
      %p81 = por %p79, %p80
      %p82 = scmp.ne.s32.totalorder %s73, %s74
      %p83 = scmp.eq.s32.totalorder %s21, 0
      %p84 = por %p82, %p83
      %p85 = scmp.ne.s32.totalorder %s73, %s74
      %p86 = scmp.eq.s32.totalorder %s22, 1
      %p87 = por %p85, %p86
      %p89 = scmp.ne.s32.totalorder %s74, %s88
      %p90 = scmp.eq.s32.totalorder %s22, 0
      %p91 = por %p89, %p90
      %s92 = ssub.s32 %s16, %s23
      %p93 = scmp.eq.s32.totalorder %s92, 0
      %s95 = sadd.s32 %s94, 1
      %s96 = scalar_select %p93, %s94, %s95
      %p99 = pneg %p93
      %p100 = scmp.eq.s32.totalorder %s16, 1
      %p101 = por %p99, %p100
      %p102 = scmp.ne.s32.totalorder %s94, %s97
      %p103 = scmp.eq.s32.totalorder %s16, 0
      %p104 = por %p102, %p103
      %p105 = scmp.ne.s32.totalorder %s94, %s97
      %p106 = scmp.eq.s32.totalorder %s21, 1
      %p107 = por %p105, %p106
      %p108 = scmp.ne.s32.totalorder %s97, %s98
      %p109 = scmp.eq.s32.totalorder %s21, 0
      %p110 = por %p108, %p109
      %p111 = scmp.ne.s32.totalorder %s97, %s98
      %p112 = scmp.eq.s32.totalorder %s22, 1
      %p113 = por %p111, %p112
      %p115 = scmp.ne.s32.totalorder %s98, %s114
      %p116 = scmp.eq.s32.totalorder %s22, 0
      %p117 = por %p115, %p116
      %p118 = scmp.le.s32.totalorder 1, %s16
      %p119 = scmp.lt.s32.totalorder %s16, 3
      %p120 = pnand %p118, %p119
      %p121 = pneg %p120
      // Predicated region
      $region9: #{tpu_custom_call.1} parent=5 // pred_check
        _
      $region10: #{tpu_custom_call.1} parent=5 // pred_check_branch
        %123 = sbr.rel (%p120) target = $region12
      $region11: #{tpu_custom_call.1} parent=5 // pred_region
        %s124 = ssub.s32 %s16, 1
        // Predicated region
        $region13: #{tpu_custom_call.1} parent=11 // pred_check
          %p125 = pneg %p63
        $region14: #{tpu_custom_call.1} parent=11 // pred_check_branch
          %127 = sbr.rel (%p125) target = $region16
        $region15: #{tpu_custom_call.1} parent=11 // pred_region
          %s129 = ssub.s32 1536, 1536
          %130 = vsyncadd [#allocation6], %s129
          %s131 = sshll.u32 [#allocation5], 4
          %s132 = int_to_ptr.vmem [resolvable:$true] %s131
          %137 = dma.hbm_to_vmem [thread:$0]  %s1, 1536, %s132, [#allocation6], 128, 128, 8
        $region16: #{tpu_custom_call.1} parent=11 // pred_fallthru
          _
        // Predicated region
        $region17: #{tpu_custom_call.1} parent=11 // pred_check
          %p138 = pneg %p84
        $region18: #{tpu_custom_call.1} parent=11 // pred_check_branch
          %140 = sbr.rel (%p138) target = $region20
        $region19: #{tpu_custom_call.1} parent=11 // pred_region
          %s142 = ssub.s32 12288, 12288
          %143 = vsyncadd [#allocation6], %s142
          %s144 = sshll.u32 [#allocation7], 4
          %s145 = int_to_ptr.vmem [resolvable:$true] %s144
          %150 = dma.hbm_to_vmem [thread:$0]  %s2, 12288, %s145, [#allocation6], 128, 128, 8
        $region20: #{tpu_custom_call.1} parent=11 // pred_fallthru
          _
      $region12: #{tpu_custom_call.1} parent=5 // pred_fallthru
        _
      %p151 = scmp.lt.s32.totalorder %s16, 2
      // Predicated region
      $region21: #{tpu_custom_call.1} parent=5 // pred_check
        %p152 = pneg %p151
      $region22: #{tpu_custom_call.1} parent=5 // pred_check_branch
        %154 = sbr.rel (%p152) target = $region24
      $region23: #{tpu_custom_call.1} parent=5 // pred_region
        // Predicated region
        $region25: #{tpu_custom_call.1} parent=23 // pred_check
          %p155 = pneg %p36
        $region26: #{tpu_custom_call.1} parent=23 // pred_check_branch
          %157 = sbr.rel (%p155) target = $region28
        $region27: #{tpu_custom_call.1} parent=23 // pred_region
          %s158 = sand.u32 %s26, 1
          %s159 = scalar_lea.sflag [#allocation3], %s158
          %s160 = sand.u32 %s26, 1
          %s161 = smul.addr %s160, 696
          %s162 = scalar_lea.vmem [#allocation2], %s161
          %s163 = smul.u32 6, %s16
          %s165 = ssub.s32 11136, 11136
          %166 = vsyncadd %s159, %s165
          %s167 = smul.addr %s163, 64
          %s168 = scalar_lea.hbm %s0, %s167
          %s169 = sshll.u32 %s162, 4
          %s170 = int_to_ptr.vmem [resolvable:$true] %s169
          %175 = dma.hbm_to_vmem [thread:$0]  %s168, 11136, %s170, %s159, 768, 384, 24
        $region28: #{tpu_custom_call.1} parent=23 // pred_fallthru
          _
      $region24: #{tpu_custom_call.1} parent=5 // pred_fallthru
        _
      %p176 = scmp.le.s32.totalorder 1, %s16
      %p177 = scmp.lt.s32.totalorder %s16, 3
      %p178 = pnand %p176, %p177
      %p179 = pneg %p178
      // Predicated region
      $region29: #{tpu_custom_call.1} parent=5 // pred_check
        _
      $region30: #{tpu_custom_call.1} parent=5 // pred_check_branch
        %181 = sbr.rel (%p178) target = $region32
      $region31: #{tpu_custom_call.1} parent=5 // pred_region
        %s182 = ssub.s32 %s16, 1
        %s183 = sand.u32 %s29, 1
        %s184 = scalar_lea.sflag [#allocation3], %s183
        %s185 = sand.u32 %s29, 1
        %s186 = smul.addr %s185, 696
        %s187 = scalar_lea.vmem [#allocation2], %s186
        // Predicated region
        $region33: #{tpu_custom_call.1} parent=31 // pred_check
          %p188 = pneg %p42
        $region34: #{tpu_custom_call.1} parent=31 // pred_check_branch
          %190 = sbr.rel (%p188) target = $region36
        $region35: #{tpu_custom_call.1} parent=31 // pred_region
          %191 = dma.done %s184, 11136
        $region36: #{tpu_custom_call.1} parent=31 // pred_fallthru
          _
        // Predicated region
        $region37: #{tpu_custom_call.1} parent=31 // pred_check
          %p192 = pneg %p63
        $region38: #{tpu_custom_call.1} parent=31 // pred_check_branch
          %194 = sbr.rel (%p192) target = $region40
        $region39: #{tpu_custom_call.1} parent=31 // pred_region
          %195 = dma.done [#allocation6], 1536
        $region40: #{tpu_custom_call.1} parent=31 // pred_fallthru
          _
        // Predicated region
        $region41: #{tpu_custom_call.1} parent=31 // pred_check
          %p196 = pneg %p84
        $region42: #{tpu_custom_call.1} parent=31 // pred_check_branch
          %198 = sbr.rel (%p196) target = $region44
        $region43: #{tpu_custom_call.1} parent=31 // pred_region
          %199 = dma.done [#allocation6], 12288
        $region44: #{tpu_custom_call.1} parent=31 // pred_fallthru
          _
        %s200 = sand.u32 %s29, 1
        %s201 = scalar_lea.sflag [#allocation3], %s200
        %s202 = sand.u32 %s29, 1
        %s203 = smul.addr %s202, 696
        %s204 = scalar_lea.vmem [#allocation2], %s203
        %p205 = pneg %p42
        %p206 = pneg %p39
        %p207 = pneg %p63
        %p208 = pneg %p60
        %p209 = pneg %p84
        %p210 = pneg %p81
        %p211 = pneg %p110
        %p212 = pneg %p107
        %s213 = sand.u32 %s97, 1
        %s214 = scalar_lea.sflag [#allocation4], %s213
        %s215 = sand.u32 %s97, 1
        %s216 = smul.addr %s215, 96
        %s217 = scalar_lea.vmem [#allocation8], %s216
        %s218 = smul.u32 6, %s21
        %v220 = vld [vmem:[#allocation5] sm:$0xff]
        %v221 = vld [vmem:[#allocation5 + $0x8] sm:$0xff]
        %v222 = vld [vmem:[#allocation5 + $0x10] sm:$0xff]
        %v223 = vld [vmem:[#allocation5 + $0x18] sm:$0xff]
        %v224 = vld [vmem:[#allocation5 + $0x20] sm:$0xff]
        %v225 = vld [vmem:[#allocation5 + $0x28] sm:$0xff]
        %v226 = vld [vmem:[#allocation5 + $0x30] sm:$0xff]
        %v227 = vld [vmem:[#allocation5 + $0x38] sm:$0xff]
        %v228 = vld [vmem:[#allocation5 + $0x40] sm:$0xff]
        %v229 = vld [vmem:[#allocation5 + $0x48] sm:$0xff]
        %v230 = vld [vmem:[#allocation5 + $0x50] sm:$0xff]
        %v231 = vld [vmem:[#allocation5 + $0x58] sm:$0x77]
        %v232 = vld [vmem:[%s187] sm:$0xff]
        %v233 = vld [vmem:[%s187 + $0x8] sm:$0xff]
        %v234 = vld [vmem:[%s187 + $0x10] sm:$0xff]
        %v235 = vld [vmem:[%s187 + $0x18] sm:$0xff]
        %v236 = vld [vmem:[%s187 + $0x20] sm:$0xff]
        %v237 = vld [vmem:[%s187 + $0x28] sm:$0xff]
        %v238 = vld [vmem:[%s187 + $0x30] sm:$0xff]
        %v239 = vld [vmem:[%s187 + $0x38] sm:$0xff]
        %v240 = vld [vmem:[%s187 + $0x40] sm:$0xff]
        %v241 = vld [vmem:[%s187 + $0x48] sm:$0xff]
        %v242 = vld [vmem:[%s187 + $0x50] sm:$0xff]
        %v243 = vld [vmem:[%s187 + $0x58] sm:$0xff]
        %v244 = vld [vmem:[%s187 + $0x60] sm:$0xff]
        %v245 = vld [vmem:[%s187 + $0x68] sm:$0xff]
        %v246 = vld [vmem:[%s187 + $0x70] sm:$0xff]
        %v247 = vld [vmem:[%s187 + $0x78] sm:$0xff]
        %v248 = vld [vmem:[%s187 + $0x80] sm:$0xff]
        %v249 = vld [vmem:[%s187 + $0x88] sm:$0xff]
        %v250 = vld [vmem:[%s187 + $0x90] sm:$0xff]
        %v251 = vld [vmem:[%s187 + $0x98] sm:$0xff]
        %v252 = vld [vmem:[%s187 + $0xa0] sm:$0xff]
        %v253 = vld [vmem:[%s187 + $0xa8] sm:$0xff]
        %v254 = vld [vmem:[%s187 + $0xb0] sm:$0xff]
        %v255 = vld [vmem:[%s187 + $0xb8] sm:$0xff]
        %v256 = vld [vmem:[%s187 + $0xc0] sm:$0xff]
        %v257 = vld [vmem:[%s187 + $0xc8] sm:$0xff]
        %v258 = vld [vmem:[%s187 + $0xd0] sm:$0xff]
        %v259 = vld [vmem:[%s187 + $0xd8] sm:$0xff]
        %v260 = vld [vmem:[%s187 + $0xe0] sm:$0xff]
        %v261 = vld [vmem:[%s187 + $0xe8] sm:$0xff]
        %v262 = vld [vmem:[%s187 + $0xf0] sm:$0xff]
        %v263 = vld [vmem:[%s187 + $0xf8] sm:$0xff]
        %v264 = vld [vmem:[%s187 + $0x100] sm:$0xff]
        %v265 = vld [vmem:[%s187 + $0x108] sm:$0xff]
        %v266 = vld [vmem:[%s187 + $0x110] sm:$0xff]
        %v267 = vld [vmem:[%s187 + $0x118] sm:$0xff]
        %v268 = vld [vmem:[%s187 + $0x120] sm:$0xff]
        %v269 = vld [vmem:[%s187 + $0x128] sm:$0xff]
        %v270 = vld [vmem:[%s187 + $0x130] sm:$0xff]
        %v271 = vld [vmem:[%s187 + $0x138] sm:$0xff]
        %v272 = vld [vmem:[%s187 + $0x140] sm:$0xff]
        %v273 = vld [vmem:[%s187 + $0x148] sm:$0xff]
        %v274 = vld [vmem:[%s187 + $0x150] sm:$0xff]
        %v275 = vld [vmem:[%s187 + $0x158] sm:$0xff]
        %v276 = vld [vmem:[%s187 + $0x160] sm:$0xff]
        %v277 = vld [vmem:[%s187 + $0x168] sm:$0xff]
        %v278 = vld [vmem:[%s187 + $0x170] sm:$0xff]
        %v279 = vld [vmem:[%s187 + $0x178] sm:$0xff]
        %v280 = vld [vmem:[%s187 + $0x180] sm:$0xff]
        %v281 = vld [vmem:[%s187 + $0x188] sm:$0xff]
        %v282 = vld [vmem:[%s187 + $0x190] sm:$0xff]
        %v283 = vld [vmem:[%s187 + $0x198] sm:$0xff]
        %v284 = vld [vmem:[%s187 + $0x1a0] sm:$0xff]
        %v285 = vld [vmem:[%s187 + $0x1a8] sm:$0xff]
        %v286 = vld [vmem:[%s187 + $0x1b0] sm:$0xff]
        %v287 = vld [vmem:[%s187 + $0x1b8] sm:$0xff]
        %v288 = vld [vmem:[%s187 + $0x1c0] sm:$0xff]
        %v289 = vld [vmem:[%s187 + $0x1c8] sm:$0xff]
        %v290 = vld [vmem:[%s187 + $0x1d0] sm:$0xff]
        %v291 = vld [vmem:[%s187 + $0x1d8] sm:$0xff]
        %v292 = vld [vmem:[%s187 + $0x1e0] sm:$0xff]
        %v293 = vld [vmem:[%s187 + $0x1e8] sm:$0xff]
        %v294 = vld [vmem:[%s187 + $0x1f0] sm:$0xff]
        %v295 = vld [vmem:[%s187 + $0x1f8] sm:$0xff]
        %v296 = vld [vmem:[%s187 + $0x200] sm:$0xff]
        %v297 = vld [vmem:[%s187 + $0x208] sm:$0xff]
        %v298 = vld [vmem:[%s187 + $0x210] sm:$0xff]
        %v299 = vld [vmem:[%s187 + $0x218] sm:$0xff]
        %v300 = vld [vmem:[%s187 + $0x220] sm:$0xff]
        %v301 = vld [vmem:[%s187 + $0x228] sm:$0xff]
        %v302 = vld [vmem:[%s187 + $0x230] sm:$0xff]
        %v303 = vld [vmem:[%s187 + $0x238] sm:$0xff]
        %v304 = vld [vmem:[%s187 + $0x240] sm:$0xff]
        %v305 = vld [vmem:[%s187 + $0x248] sm:$0xff]
        %v306 = vld [vmem:[%s187 + $0x250] sm:$0xff]
        %v307 = vld [vmem:[%s187 + $0x258] sm:$0xff]
        %v308 = vld [vmem:[%s187 + $0x260] sm:$0xff]
        %v309 = vld [vmem:[%s187 + $0x268] sm:$0xff]
        %v310 = vld [vmem:[%s187 + $0x270] sm:$0xff]
        %v311 = vld [vmem:[%s187 + $0x278] sm:$0xff]
        %v312 = vld [vmem:[%s187 + $0x280] sm:$0xff]
        %v313 = vld [vmem:[%s187 + $0x288] sm:$0xff]
        %v314 = vld [vmem:[%s187 + $0x290] sm:$0xff]
        %v315 = vld [vmem:[%s187 + $0x298] sm:$0xff]
        %v316 = vld [vmem:[%s187 + $0x2a0] sm:$0x11]
        %v317 = vld [vmem:[%s187 + $0x2a8] sm:$0x11]
        %v318 = vld [vmem:[%s187 + $0x2b0] sm:$0x11]
        %v331 = vunpack.c.l.b16 %v220
        %v332 = vunpack.c.h.b16 %v220
        %v333 = vunpack.c.l.b16 %v221
        %v334 = vunpack.c.h.b16 %v221
        %v335 = vunpack.c.l.b16 %v222
        %v336 = vunpack.c.h.b16 %v222
        %v337 = vunpack.c.l.b16 %v223
        %v338 = vunpack.c.h.b16 %v223
        %v339 = vunpack.c.l.b16 %v224
        %v340 = vunpack.c.h.b16 %v224
        %v341 = vunpack.c.l.b16 %v225
        %v342 = vunpack.c.h.b16 %v225
        %v343 = vunpack.c.l.b16 %v226
        %v344 = vunpack.c.h.b16 %v226
        %v345 = vunpack.c.l.b16 %v227
        %v346 = vunpack.c.h.b16 %v227
        %v347 = vunpack.c.l.b16 %v228
        %v348 = vunpack.c.h.b16 %v228
        %v349 = vunpack.c.l.b16 %v229
        %v350 = vunpack.c.h.b16 %v229
        %v351 = vunpack.c.l.b16 %v230
        %v352 = vunpack.c.h.b16 %v230
        %v353 = vunpack.c.l.b16 %v231
        %v354 = vunpack.c.h.b16 %v231
        %v355 = vpack.c.b16 %v333, %v331
        %v356 = vpack.c.b16 %v334, %v332
        %v357 = vpack.c.b16 %v337, %v335
        %v358 = vpack.c.b16 %v338, %v336
        %v359 = vpack.c.b16 %v341, %v339
        %v360 = vpack.c.b16 %v342, %v340
        %v361 = vpack.c.b16 %v345, %v343
        %v362 = vpack.c.b16 %v346, %v344
        %v363 = vpack.c.b16 %v349, %v347
        %v364 = vpack.c.b16 %v350, %v348
        %v365 = vpack.c.b16 %v353, %v351
        %v366 = vpack.c.b16 %v354, %v352
        %v460 = vunpack.c.l.b16 %v232
        %v461 = vunpack.c.h.b16 %v232
        %v462 = vunpack.c.l.b16 %v233
        %v463 = vunpack.c.h.b16 %v233
        %v464 = vunpack.c.l.b16 %v234
        %v465 = vunpack.c.h.b16 %v234
        %v466 = vunpack.c.l.b16 %v235
        %v467 = vunpack.c.h.b16 %v235
        %v468 = vunpack.c.l.b16 %v236
        %v469 = vunpack.c.h.b16 %v236
        %v470 = vunpack.c.l.b16 %v237
        %v471 = vunpack.c.h.b16 %v237
        %v472 = vunpack.c.l.b16 %v238
        %v473 = vunpack.c.h.b16 %v238
        %v474 = vunpack.c.l.b16 %v239
        %v475 = vunpack.c.h.b16 %v239
        %v476 = vunpack.c.l.b16 %v240
        %v477 = vunpack.c.h.b16 %v240
        %v478 = vunpack.c.l.b16 %v241
        %v479 = vunpack.c.h.b16 %v241
        %v480 = vunpack.c.l.b16 %v242
        %v481 = vunpack.c.h.b16 %v242
        %v482 = vunpack.c.l.b16 %v243
        %v483 = vunpack.c.h.b16 %v243
        %v484 = vunpack.c.l.b16 %v244
        %v485 = vunpack.c.h.b16 %v244
        %v486 = vunpack.c.l.b16 %v245
        %v487 = vunpack.c.h.b16 %v245
        %v488 = vunpack.c.l.b16 %v246
        %v489 = vunpack.c.h.b16 %v246
        %v490 = vunpack.c.l.b16 %v247
        %v491 = vunpack.c.h.b16 %v247
        %v492 = vunpack.c.l.b16 %v248
        %v493 = vunpack.c.h.b16 %v248
        %v494 = vunpack.c.l.b16 %v249
        %v495 = vunpack.c.h.b16 %v249
        %v496 = vunpack.c.l.b16 %v250
        %v497 = vunpack.c.h.b16 %v250
        %v498 = vunpack.c.l.b16 %v251
        %v499 = vunpack.c.h.b16 %v251
        %v500 = vunpack.c.l.b16 %v252
        %v501 = vunpack.c.h.b16 %v252
        %v502 = vunpack.c.l.b16 %v253
        %v503 = vunpack.c.h.b16 %v253
        %v504 = vunpack.c.l.b16 %v254
        %v505 = vunpack.c.h.b16 %v254
        %v506 = vunpack.c.l.b16 %v255
        %v507 = vunpack.c.h.b16 %v255
        %v508 = vunpack.c.l.b16 %v256
        %v509 = vunpack.c.h.b16 %v256
        %v510 = vunpack.c.l.b16 %v257
        %v511 = vunpack.c.h.b16 %v257
        %v512 = vunpack.c.l.b16 %v258
        %v513 = vunpack.c.h.b16 %v258
        %v514 = vunpack.c.l.b16 %v259
        %v515 = vunpack.c.h.b16 %v259
        %v516 = vunpack.c.l.b16 %v260
        %v517 = vunpack.c.h.b16 %v260
        %v518 = vunpack.c.l.b16 %v261
        %v519 = vunpack.c.h.b16 %v261
        %v520 = vunpack.c.l.b16 %v262
        %v521 = vunpack.c.h.b16 %v262
        %v522 = vunpack.c.l.b16 %v263
        %v523 = vunpack.c.h.b16 %v263
        %v524 = vunpack.c.l.b16 %v264
        %v525 = vunpack.c.h.b16 %v264
        %v526 = vunpack.c.l.b16 %v265
        %v527 = vunpack.c.h.b16 %v265
        %v528 = vunpack.c.l.b16 %v266
        %v529 = vunpack.c.h.b16 %v266
        %v530 = vunpack.c.l.b16 %v267
        %v531 = vunpack.c.h.b16 %v267
        %v532 = vunpack.c.l.b16 %v268
        %v533 = vunpack.c.h.b16 %v268
        %v534 = vunpack.c.l.b16 %v269
        %v535 = vunpack.c.h.b16 %v269
        %v536 = vunpack.c.l.b16 %v270
        %v537 = vunpack.c.h.b16 %v270
        %v538 = vunpack.c.l.b16 %v271
        %v539 = vunpack.c.h.b16 %v271
        %v540 = vunpack.c.l.b16 %v272
        %v541 = vunpack.c.h.b16 %v272
        %v542 = vunpack.c.l.b16 %v273
        %v543 = vunpack.c.h.b16 %v273
        %v544 = vunpack.c.l.b16 %v274
        %v545 = vunpack.c.h.b16 %v274
        %v546 = vunpack.c.l.b16 %v275
        %v547 = vunpack.c.h.b16 %v275
        %v548 = vunpack.c.l.b16 %v276
        %v549 = vunpack.c.h.b16 %v276
        %v550 = vunpack.c.l.b16 %v277
        %v551 = vunpack.c.h.b16 %v277
        %v552 = vunpack.c.l.b16 %v278
        %v553 = vunpack.c.h.b16 %v278
        %v554 = vunpack.c.l.b16 %v279
        %v555 = vunpack.c.h.b16 %v279
        %v556 = vunpack.c.l.b16 %v280
        %v557 = vunpack.c.h.b16 %v280
        %v558 = vunpack.c.l.b16 %v281
        %v559 = vunpack.c.h.b16 %v281
        %v560 = vunpack.c.l.b16 %v282
        %v561 = vunpack.c.h.b16 %v282
        %v562 = vunpack.c.l.b16 %v283
        %v563 = vunpack.c.h.b16 %v283
        %v564 = vunpack.c.l.b16 %v284
        %v565 = vunpack.c.h.b16 %v284
        %v566 = vunpack.c.l.b16 %v285
        %v567 = vunpack.c.h.b16 %v285
        %v568 = vunpack.c.l.b16 %v286
        %v569 = vunpack.c.h.b16 %v286
        %v570 = vunpack.c.l.b16 %v287
        %v571 = vunpack.c.h.b16 %v287
        %v572 = vunpack.c.l.b16 %v288
        %v573 = vunpack.c.h.b16 %v288
        %v574 = vunpack.c.l.b16 %v289
        %v575 = vunpack.c.h.b16 %v289
        %v576 = vunpack.c.l.b16 %v290
        %v577 = vunpack.c.h.b16 %v290
        %v578 = vunpack.c.l.b16 %v291
        %v579 = vunpack.c.h.b16 %v291
        %v580 = vunpack.c.l.b16 %v292
        %v581 = vunpack.c.h.b16 %v292
        %v582 = vunpack.c.l.b16 %v293
        %v583 = vunpack.c.h.b16 %v293
        %v584 = vunpack.c.l.b16 %v294
        %v585 = vunpack.c.h.b16 %v294
        %v586 = vunpack.c.l.b16 %v295
        %v587 = vunpack.c.h.b16 %v295
        %v588 = vunpack.c.l.b16 %v296
        %v589 = vunpack.c.h.b16 %v296
        %v590 = vunpack.c.l.b16 %v297
        %v591 = vunpack.c.h.b16 %v297
        %v592 = vunpack.c.l.b16 %v298
        %v593 = vunpack.c.h.b16 %v298
        %v594 = vunpack.c.l.b16 %v299
        %v595 = vunpack.c.h.b16 %v299
        %v596 = vunpack.c.l.b16 %v300
        %v597 = vunpack.c.h.b16 %v300
        %v598 = vunpack.c.l.b16 %v301
        %v599 = vunpack.c.h.b16 %v301
        %v600 = vunpack.c.l.b16 %v302
        %v601 = vunpack.c.h.b16 %v302
        %v602 = vunpack.c.l.b16 %v303
        %v603 = vunpack.c.h.b16 %v303
        %v604 = vunpack.c.l.b16 %v304
        %v605 = vunpack.c.h.b16 %v304
        %v606 = vunpack.c.l.b16 %v305
        %v607 = vunpack.c.h.b16 %v305
        %v608 = vunpack.c.l.b16 %v306
        %v609 = vunpack.c.h.b16 %v306
        %v610 = vunpack.c.l.b16 %v307
        %v611 = vunpack.c.h.b16 %v307
        %v612 = vunpack.c.l.b16 %v308
        %v613 = vunpack.c.h.b16 %v308
        %v614 = vunpack.c.l.b16 %v309
        %v615 = vunpack.c.h.b16 %v309
        %v616 = vunpack.c.l.b16 %v310
        %v617 = vunpack.c.h.b16 %v310
        %v618 = vunpack.c.l.b16 %v311
        %v619 = vunpack.c.h.b16 %v311
        %v620 = vunpack.c.l.b16 %v312
        %v621 = vunpack.c.h.b16 %v312
        %v622 = vunpack.c.l.b16 %v313
        %v623 = vunpack.c.h.b16 %v313
        %v624 = vunpack.c.l.b16 %v314
        %v625 = vunpack.c.h.b16 %v314
        %v626 = vunpack.c.l.b16 %v315
        %v627 = vunpack.c.h.b16 %v315
        %v628 = vunpack.c.l.b16 %v316
        %v629 = vunpack.c.h.b16 %v316
        %v630 = vunpack.c.l.b16 %v317
        %v631 = vunpack.c.h.b16 %v317
        %v632 = vunpack.c.l.b16 %v318
        %v633 = vunpack.c.h.b16 %v318
        %v634 = vpack.c.b16 %v466, %v460
        %v635 = vpack.c.b16 %v467, %v461
        %v636 = vpack.c.b16 %v468, %v462
        %v637 = vpack.c.b16 %v469, %v463
        %v638 = vpack.c.b16 %v470, %v464
        %v639 = vpack.c.b16 %v471, %v465
        %v640 = vpack.c.b16 %v478, %v472
        %v641 = vpack.c.b16 %v479, %v473
        %v642 = vpack.c.b16 %v480, %v474
        %v643 = vpack.c.b16 %v481, %v475
        %v644 = vpack.c.b16 %v482, %v476
        %v645 = vpack.c.b16 %v483, %v477
        %v646 = vpack.c.b16 %v490, %v484
        %v647 = vpack.c.b16 %v491, %v485
        %v648 = vpack.c.b16 %v492, %v486
        %v649 = vpack.c.b16 %v493, %v487
        %v650 = vpack.c.b16 %v494, %v488
        %v651 = vpack.c.b16 %v495, %v489
        %v652 = vpack.c.b16 %v502, %v496
        %v653 = vpack.c.b16 %v503, %v497
        %v654 = vpack.c.b16 %v504, %v498
        %v655 = vpack.c.b16 %v505, %v499
        %v656 = vpack.c.b16 %v506, %v500
        %v657 = vpack.c.b16 %v507, %v501
        %v658 = vpack.c.b16 %v514, %v508
        %v659 = vpack.c.b16 %v515, %v509
        %v660 = vpack.c.b16 %v516, %v510
        %v661 = vpack.c.b16 %v517, %v511
        %v662 = vpack.c.b16 %v518, %v512
        %v663 = vpack.c.b16 %v519, %v513
        %v664 = vpack.c.b16 %v526, %v520
        %v665 = vpack.c.b16 %v527, %v521
        %v666 = vpack.c.b16 %v528, %v522
        %v667 = vpack.c.b16 %v529, %v523
        %v668 = vpack.c.b16 %v530, %v524
        %v669 = vpack.c.b16 %v531, %v525
        %v670 = vpack.c.b16 %v538, %v532
        %v671 = vpack.c.b16 %v539, %v533
        %v672 = vpack.c.b16 %v540, %v534
        %v673 = vpack.c.b16 %v541, %v535
        %v674 = vpack.c.b16 %v542, %v536
        %v675 = vpack.c.b16 %v543, %v537
        %v676 = vpack.c.b16 %v550, %v544
        %v677 = vpack.c.b16 %v551, %v545
        %v678 = vpack.c.b16 %v552, %v546
        %v679 = vpack.c.b16 %v553, %v547
        %v680 = vpack.c.b16 %v554, %v548
        %v681 = vpack.c.b16 %v555, %v549
        %v682 = vpack.c.b16 %v562, %v556
        %v683 = vpack.c.b16 %v563, %v557
        %v684 = vpack.c.b16 %v564, %v558
        %v685 = vpack.c.b16 %v565, %v559
        %v686 = vpack.c.b16 %v566, %v560
        %v687 = vpack.c.b16 %v567, %v561
        %v688 = vpack.c.b16 %v574, %v568
        %v689 = vpack.c.b16 %v575, %v569
        %v690 = vpack.c.b16 %v576, %v570
        %v691 = vpack.c.b16 %v577, %v571
        %v692 = vpack.c.b16 %v578, %v572
        %v693 = vpack.c.b16 %v579, %v573
        %v694 = vpack.c.b16 %v586, %v580
        %v695 = vpack.c.b16 %v587, %v581
        %v696 = vpack.c.b16 %v588, %v582
        %v697 = vpack.c.b16 %v589, %v583
        %v698 = vpack.c.b16 %v590, %v584
        %v699 = vpack.c.b16 %v591, %v585
        %v700 = vpack.c.b16 %v598, %v592
        %v701 = vpack.c.b16 %v599, %v593
        %v702 = vpack.c.b16 %v600, %v594
        %v703 = vpack.c.b16 %v601, %v595
        %v704 = vpack.c.b16 %v602, %v596
        %v705 = vpack.c.b16 %v603, %v597
        %v706 = vpack.c.b16 %v610, %v604
        %v707 = vpack.c.b16 %v611, %v605
        %v708 = vpack.c.b16 %v612, %v606
        %v709 = vpack.c.b16 %v613, %v607
        %v710 = vpack.c.b16 %v614, %v608
        %v711 = vpack.c.b16 %v615, %v609
        %v712 = vpack.c.b16 %v622, %v616
        %v713 = vpack.c.b16 %v623, %v617
        %v714 = vpack.c.b16 %v624, %v618
        %v715 = vpack.c.b16 %v625, %v619
        %v716 = vpack.c.b16 %v626, %v620
        %v717 = vpack.c.b16 %v627, %v621
        %v718 = vpack.c.b16 %v628, %v628
        %v719 = vpack.c.b16 %v629, %v629
        %v720 = vpack.c.b16 %v630, %v630
        %v721 = vpack.c.b16 %v631, %v631
        %v722 = vpack.c.b16 %v632, %v632
        %v723 = vpack.c.b16 %v633, %v633
        %vm808 = vcmask 793600
        %v810 = vsel %vm808, %v356, 0
        %v813 = vsel %vm808, %v358, 0
        %v816 = vsel %vm808, %v360, 0
        %v819 = vsel %vm808, %v362, 0
        %v822 = vsel %vm808, %v364, 0
        %v825 = vsel %vm808, %v366, 0
        %vm827 = vcmask 1040384
        %v828 = vsel 0, 4294967295, 65535
        %v829 = vsel %vm827, %v828, 0
        %v831 = vand.u32 %v718, %v829
        %v834 = vand.u32 %v719, %v829
        %v837 = vand.u32 %v720, %v829
        %v840 = vand.u32 %v721, %v829
        %v843 = vand.u32 %v722, %v829
        %v846 = vand.u32 %v723, %v829
        %848 = vmatprep.subr.bf16.mxu0 %v677
        %849 = vmatpush1.bf16.msra.mxu0 %v676
        %850 = vmatprep.subr.bf16.mxu0 %v671
        %851 = vmatpush1.bf16.msra.mxu0 %v670
        %852 = vmatprep.subr.bf16.mxu0 %v665
        %853 = vmatpush1.bf16.msra.mxu0 %v664
        %854 = vmatprep.subr.bf16.mxu0 %v659
        %855 = vmatpush1.bf16.msra.mxu0 %v658
        %856 = vmatprep.subr.bf16.mxu0 %v653
        %857 = vmatpush1.bf16.msra.mxu0 %v652
        %858 = vmatprep.subr.bf16.mxu0 %v647
        %859 = vmatpush1.bf16.msra.mxu0 %v646
        %860 = vmatprep.subr.bf16.mxu0 %v641
        %861 = vmatpush1.bf16.msra.mxu0 %v640
        %862 = vmatprep.subr.bf16.mxu0 %v635
        %863 = vmatpush1.bf16.msra.mxu0 %v634
        %864 = vmatprep.subr.bf16.mxu0 0
        %865 = vmatpush2.bf16.msra.mxu0 0
        %866 = vmatprep.subr.bf16.mxu0 %v834
        %867 = vmatpush2.bf16.msra.mxu0 %v831
        %868 = vmatprep.subr.bf16.mxu0 %v713
        %869 = vmatpush2.bf16.msra.mxu0 %v712
        %870 = vmatprep.subr.bf16.mxu0 %v707
        %871 = vmatpush2.bf16.msra.mxu0 %v706
        %872 = vmatprep.subr.bf16.mxu0 %v701
        %873 = vmatpush2.bf16.msra.mxu0 %v700
        %874 = vmatprep.subr.bf16.mxu0 %v695
        %875 = vmatpush2.bf16.msra.mxu0 %v694
        %876 = vmatprep.subr.bf16.mxu0 %v689
        %877 = vmatpush2.bf16.msra.mxu0 %v688
        %878 = vmatprep.subr.bf16.mxu0 %v683
        %879 = vmatpush2.bf16.msra.mxu0 %v682
        %880 = vmatprep.mubr.bf16.mxu0 %v810
        %881 = vmatmul.mubr.bf16.gmra.mxu0 %v355
        %v882 = vpop.f32.mrf.mxu0
        %v883 = vadd.f32 0.0, %v882
        %v884 = vpop.f32.mrf.mxu0
        %v885 = vadd.f32 0.0, %v884
        %v886 = vpop.f32.mrf.mxu0
        %v887 = vadd.f32 0.0, %v886
        %v888 = vpop.f32.mrf.mxu0
        %v889 = vadd.f32 0.0, %v888
        %890 = vmatprep.mubr.bf16.mxu0 %v813
        %891 = vmatmul.mubr.bf16.gmra.mxu0 %v357
        %v892 = vpop.f32.mrf.mxu0
        %v893 = vadd.f32 0.0, %v892
        %v894 = vpop.f32.mrf.mxu0
        %v895 = vadd.f32 0.0, %v894
        %v896 = vpop.f32.mrf.mxu0
        %v897 = vadd.f32 0.0, %v896
        %v898 = vpop.f32.mrf.mxu0
        %v899 = vadd.f32 0.0, %v898
        %900 = vmatprep.mubr.bf16.mxu0 %v816
        %901 = vmatmul.mubr.bf16.gmra.mxu0 %v359
        %v902 = vpop.f32.mrf.mxu0
        %v903 = vadd.f32 0.0, %v902
        %v904 = vpop.f32.mrf.mxu0
        %v905 = vadd.f32 0.0, %v904
        %v906 = vpop.f32.mrf.mxu0
        %v907 = vadd.f32 0.0, %v906
        %v908 = vpop.f32.mrf.mxu0
        %v909 = vadd.f32 0.0, %v908
        %910 = vmatprep.mubr.bf16.mxu0 %v819
        %911 = vmatmul.mubr.bf16.gmra.mxu0 %v361
        %v912 = vpop.f32.mrf.mxu0
        %v913 = vadd.f32 0.0, %v912
        %v914 = vpop.f32.mrf.mxu0
        %v915 = vadd.f32 0.0, %v914
        %v916 = vpop.f32.mrf.mxu0
        %v917 = vadd.f32 0.0, %v916
        %v918 = vpop.f32.mrf.mxu0
        %v919 = vadd.f32 0.0, %v918
        %920 = vmatprep.mubr.bf16.mxu0 %v822
        %921 = vmatmul.mubr.bf16.gmra.mxu0 %v363
        %v922 = vpop.f32.mrf.mxu0
        %v923 = vadd.f32 0.0, %v922
        %v924 = vpop.f32.mrf.mxu0
        %v925 = vadd.f32 0.0, %v924
        %v926 = vpop.f32.mrf.mxu0
        %v927 = vadd.f32 0.0, %v926
        %v928 = vpop.f32.mrf.mxu0
        %v929 = vadd.f32 0.0, %v928
        %930 = vmatprep.mubr.bf16.mxu0 %v825
        %931 = vmatmul.mubr.bf16.gmra.mxu0 %v365
        %v932 = vpop.f32.mrf.mxu0
        %v933 = vadd.f32 0.0, %v932
        %v934 = vpop.f32.mrf.mxu0
        %v935 = vadd.f32 0.0, %v934
        %v936 = vpop.f32.mrf.mxu0
        %v937 = vadd.f32 0.0, %v936
        %v938 = vpop.f32.mrf.mxu0
        %v939 = vadd.f32 0.0, %v938
        %940 = vdwg.mxu0
        %941 = vmatprep.subr.bf16.mxu0 %v679
        %942 = vmatpush1.bf16.msra.mxu0 %v678
        %943 = vmatprep.subr.bf16.mxu0 %v673
        %944 = vmatpush1.bf16.msra.mxu0 %v672
        %945 = vmatprep.subr.bf16.mxu0 %v667
        %946 = vmatpush1.bf16.msra.mxu0 %v666
        %947 = vmatprep.subr.bf16.mxu0 %v661
        %948 = vmatpush1.bf16.msra.mxu0 %v660
        %949 = vmatprep.subr.bf16.mxu0 %v655
        %950 = vmatpush1.bf16.msra.mxu0 %v654
        %951 = vmatprep.subr.bf16.mxu0 %v649
        %952 = vmatpush1.bf16.msra.mxu0 %v648
        %953 = vmatprep.subr.bf16.mxu0 %v643
        %954 = vmatpush1.bf16.msra.mxu0 %v642
        %955 = vmatprep.subr.bf16.mxu0 %v637
        %956 = vmatpush1.bf16.msra.mxu0 %v636
        %957 = vmatprep.subr.bf16.mxu0 0
        %958 = vmatpush2.bf16.msra.mxu0 0
        %959 = vmatprep.subr.bf16.mxu0 %v840
        %960 = vmatpush2.bf16.msra.mxu0 %v837
        %961 = vmatprep.subr.bf16.mxu0 %v715
        %962 = vmatpush2.bf16.msra.mxu0 %v714
        %963 = vmatprep.subr.bf16.mxu0 %v709
        %964 = vmatpush2.bf16.msra.mxu0 %v708
        %965 = vmatprep.subr.bf16.mxu0 %v703
        %966 = vmatpush2.bf16.msra.mxu0 %v702
        %967 = vmatprep.subr.bf16.mxu0 %v697
        %968 = vmatpush2.bf16.msra.mxu0 %v696
        %969 = vmatprep.subr.bf16.mxu0 %v691
        %970 = vmatpush2.bf16.msra.mxu0 %v690
        %971 = vmatprep.subr.bf16.mxu0 %v685
        %972 = vmatpush2.bf16.msra.mxu0 %v684
        %973 = vmatprep.mubr.bf16.mxu0 %v810
        %974 = vmatmul.mubr.bf16.gmra.mxu0 %v355
        %v975 = vpop.f32.mrf.mxu0
        %v976 = vadd.f32 0.0, %v975
        %v977 = vpop.f32.mrf.mxu0
        %v978 = vadd.f32 0.0, %v977
        %v979 = vpop.f32.mrf.mxu0
        %v980 = vadd.f32 0.0, %v979
        %v981 = vpop.f32.mrf.mxu0
        %v982 = vadd.f32 0.0, %v981
        %983 = vmatprep.mubr.bf16.mxu0 %v813
        %984 = vmatmul.mubr.bf16.gmra.mxu0 %v357
        %v985 = vpop.f32.mrf.mxu0
        %v986 = vadd.f32 0.0, %v985
        %v987 = vpop.f32.mrf.mxu0
        %v988 = vadd.f32 0.0, %v987
        %v989 = vpop.f32.mrf.mxu0
        %v990 = vadd.f32 0.0, %v989
        %v991 = vpop.f32.mrf.mxu0
        %v992 = vadd.f32 0.0, %v991
        %993 = vmatprep.mubr.bf16.mxu0 %v816
        %994 = vmatmul.mubr.bf16.gmra.mxu0 %v359
        %v995 = vpop.f32.mrf.mxu0
        %v996 = vadd.f32 0.0, %v995
        %v997 = vpop.f32.mrf.mxu0
        %v998 = vadd.f32 0.0, %v997
        %v999 = vpop.f32.mrf.mxu0
        %v1000 = vadd.f32 0.0, %v999
        %v1001 = vpop.f32.mrf.mxu0
        %v1002 = vadd.f32 0.0, %v1001
        %1003 = vmatprep.mubr.bf16.mxu0 %v819
        %1004 = vmatmul.mubr.bf16.gmra.mxu0 %v361
        %v1005 = vpop.f32.mrf.mxu0
        %v1006 = vadd.f32 0.0, %v1005
        %v1007 = vpop.f32.mrf.mxu0
        %v1008 = vadd.f32 0.0, %v1007
        %v1009 = vpop.f32.mrf.mxu0
        %v1010 = vadd.f32 0.0, %v1009
        %v1011 = vpop.f32.mrf.mxu0
        %v1012 = vadd.f32 0.0, %v1011
        %1013 = vmatprep.mubr.bf16.mxu0 %v822
        %1014 = vmatmul.mubr.bf16.gmra.mxu0 %v363
        %v1015 = vpop.f32.mrf.mxu0
        %v1016 = vadd.f32 0.0, %v1015
        %v1017 = vpop.f32.mrf.mxu0
        %v1018 = vadd.f32 0.0, %v1017
        %v1019 = vpop.f32.mrf.mxu0
        %v1020 = vadd.f32 0.0, %v1019
        %v1021 = vpop.f32.mrf.mxu0
        %v1022 = vadd.f32 0.0, %v1021
        %1023 = vmatprep.mubr.bf16.mxu0 %v825
        %1024 = vmatmul.mubr.bf16.gmra.mxu0 %v365
        %v1025 = vpop.f32.mrf.mxu0
        %v1026 = vadd.f32 0.0, %v1025
        %v1027 = vpop.f32.mrf.mxu0
        %v1028 = vadd.f32 0.0, %v1027
        %v1029 = vpop.f32.mrf.mxu0
        %v1030 = vadd.f32 0.0, %v1029
        %v1031 = vpop.f32.mrf.mxu0
        %v1032 = vadd.f32 0.0, %v1031
        %1033 = vdwg.mxu0
        %1034 = vmatprep.subr.bf16.mxu0 %v681
        %1035 = vmatpush1.bf16.msra.mxu0 %v680
        %1036 = vmatprep.subr.bf16.mxu0 %v675
        %1037 = vmatpush1.bf16.msra.mxu0 %v674
        %1038 = vmatprep.subr.bf16.mxu0 %v669
        %1039 = vmatpush1.bf16.msra.mxu0 %v668
        %1040 = vmatprep.subr.bf16.mxu0 %v663
        %1041 = vmatpush1.bf16.msra.mxu0 %v662
        %1042 = vmatprep.subr.bf16.mxu0 %v657
        %1043 = vmatpush1.bf16.msra.mxu0 %v656
        %1044 = vmatprep.subr.bf16.mxu0 %v651
        %1045 = vmatpush1.bf16.msra.mxu0 %v650
        %1046 = vmatprep.subr.bf16.mxu0 %v645
        %1047 = vmatpush1.bf16.msra.mxu0 %v644
        %1048 = vmatprep.subr.bf16.mxu0 %v639
        %1049 = vmatpush1.bf16.msra.mxu0 %v638
        %1050 = vmatprep.subr.bf16.mxu0 0
        %1051 = vmatpush2.bf16.msra.mxu0 0
        %1052 = vmatprep.subr.bf16.mxu0 %v846
        %1053 = vmatpush2.bf16.msra.mxu0 %v843
        %1054 = vmatprep.subr.bf16.mxu0 %v717
        %1055 = vmatpush2.bf16.msra.mxu0 %v716
        %1056 = vmatprep.subr.bf16.mxu0 %v711
        %1057 = vmatpush2.bf16.msra.mxu0 %v710
        %1058 = vmatprep.subr.bf16.mxu0 %v705
        %1059 = vmatpush2.bf16.msra.mxu0 %v704
        %1060 = vmatprep.subr.bf16.mxu0 %v699
        %1061 = vmatpush2.bf16.msra.mxu0 %v698
        %1062 = vmatprep.subr.bf16.mxu0 %v693
        %1063 = vmatpush2.bf16.msra.mxu0 %v692
        %1064 = vmatprep.subr.bf16.mxu0 %v687
        %1065 = vmatpush2.bf16.msra.mxu0 %v686
        %1066 = vmatprep.mubr.bf16.mxu0 %v810
        %1067 = vmatmul.mubr.bf16.gmra.mxu0 %v355
        %v1068 = vpop.f32.mrf.mxu0
        %v1069 = vadd.f32 0.0, %v1068
        %v1070 = vpop.f32.mrf.mxu0
        %v1071 = vadd.f32 0.0, %v1070
        %v1072 = vpop.f32.mrf.mxu0
        %v1073 = vadd.f32 0.0, %v1072
        %v1074 = vpop.f32.mrf.mxu0
        %v1075 = vadd.f32 0.0, %v1074
        %1076 = vmatprep.mubr.bf16.mxu0 %v813
        %1077 = vmatmul.mubr.bf16.gmra.mxu0 %v357
        %v1078 = vpop.f32.mrf.mxu0
        %v1079 = vadd.f32 0.0, %v1078
        %v1080 = vpop.f32.mrf.mxu0
        %v1081 = vadd.f32 0.0, %v1080
        %v1082 = vpop.f32.mrf.mxu0
        %v1083 = vadd.f32 0.0, %v1082
        %v1084 = vpop.f32.mrf.mxu0
        %v1085 = vadd.f32 0.0, %v1084
        %1086 = vmatprep.mubr.bf16.mxu0 %v816
        %1087 = vmatmul.mubr.bf16.gmra.mxu0 %v359
        %v1088 = vpop.f32.mrf.mxu0
        %v1089 = vadd.f32 0.0, %v1088
        %v1090 = vpop.f32.mrf.mxu0
        %v1091 = vadd.f32 0.0, %v1090
        %v1092 = vpop.f32.mrf.mxu0
        %v1093 = vadd.f32 0.0, %v1092
        %v1094 = vpop.f32.mrf.mxu0
        %v1095 = vadd.f32 0.0, %v1094
        %1096 = vmatprep.mubr.bf16.mxu0 %v819
        %1097 = vmatmul.mubr.bf16.gmra.mxu0 %v361
        %v1098 = vpop.f32.mrf.mxu0
        %v1099 = vadd.f32 0.0, %v1098
        %v1100 = vpop.f32.mrf.mxu0
        %v1101 = vadd.f32 0.0, %v1100
        %v1102 = vpop.f32.mrf.mxu0
        %v1103 = vadd.f32 0.0, %v1102
        %v1104 = vpop.f32.mrf.mxu0
        %v1105 = vadd.f32 0.0, %v1104
        %1106 = vmatprep.mubr.bf16.mxu0 %v822
        %1107 = vmatmul.mubr.bf16.gmra.mxu0 %v363
        %v1108 = vpop.f32.mrf.mxu0
        %v1109 = vadd.f32 0.0, %v1108
        %v1110 = vpop.f32.mrf.mxu0
        %v1111 = vadd.f32 0.0, %v1110
        %v1112 = vpop.f32.mrf.mxu0
        %v1113 = vadd.f32 0.0, %v1112
        %v1114 = vpop.f32.mrf.mxu0
        %v1115 = vadd.f32 0.0, %v1114
        %1116 = vmatprep.mubr.bf16.mxu0 %v825
        %1117 = vmatmul.mubr.bf16.gmra.mxu0 %v365
        %v1118 = vpop.f32.mrf.mxu0
        %v1119 = vadd.f32 0.0, %v1118
        %v1120 = vpop.f32.mrf.mxu0
        %v1121 = vadd.f32 0.0, %v1120
        %v1122 = vpop.f32.mrf.mxu0
        %v1123 = vadd.f32 0.0, %v1122
        %v1124 = vpop.f32.mrf.mxu0
        %v1125 = vadd.f32 0.0, %v1124
        %1126 = vdwg.mxu0
        %v1127 = vmax.f32 %v883, 0.0
        %v1128 = vmax.f32 %v885, 0.0
        %v1129 = vmax.f32 %v976, 0.0
        %v1130 = vmax.f32 %v978, 0.0
        %v1131 = vmax.f32 %v1069, 0.0
        %v1132 = vmax.f32 %v1071, 0.0
        %v1133 = vmax.f32 %v887, 0.0
        %v1134 = vmax.f32 %v889, 0.0
        %v1135 = vmax.f32 %v980, 0.0
        %v1136 = vmax.f32 %v982, 0.0
        %v1137 = vmax.f32 %v1073, 0.0
        %v1138 = vmax.f32 %v1075, 0.0
        %v1139 = vmax.f32 %v893, 0.0
        %v1140 = vmax.f32 %v895, 0.0
        %v1141 = vmax.f32 %v986, 0.0
        %v1142 = vmax.f32 %v988, 0.0
        %v1143 = vmax.f32 %v1079, 0.0
        %v1144 = vmax.f32 %v1081, 0.0
        %v1145 = vmax.f32 %v897, 0.0
        %v1146 = vmax.f32 %v899, 0.0
        %v1147 = vmax.f32 %v990, 0.0
        %v1148 = vmax.f32 %v992, 0.0
        %v1149 = vmax.f32 %v1083, 0.0
        %v1150 = vmax.f32 %v1085, 0.0
        %v1151 = vmax.f32 %v903, 0.0
        %v1152 = vmax.f32 %v905, 0.0
        %v1153 = vmax.f32 %v996, 0.0
        %v1154 = vmax.f32 %v998, 0.0
        %v1155 = vmax.f32 %v1089, 0.0
        %v1156 = vmax.f32 %v1091, 0.0
        %v1157 = vmax.f32 %v907, 0.0
        %v1158 = vmax.f32 %v909, 0.0
        %v1159 = vmax.f32 %v1000, 0.0
        %v1160 = vmax.f32 %v1002, 0.0
        %v1161 = vmax.f32 %v1093, 0.0
        %v1162 = vmax.f32 %v1095, 0.0
        %v1163 = vmax.f32 %v913, 0.0
        %v1164 = vmax.f32 %v915, 0.0
        %v1165 = vmax.f32 %v1006, 0.0
        %v1166 = vmax.f32 %v1008, 0.0
        %v1167 = vmax.f32 %v1099, 0.0
        %v1168 = vmax.f32 %v1101, 0.0
        %v1169 = vmax.f32 %v917, 0.0
        %v1170 = vmax.f32 %v919, 0.0
        %v1171 = vmax.f32 %v1010, 0.0
        %v1172 = vmax.f32 %v1012, 0.0
        %v1173 = vmax.f32 %v1103, 0.0
        %v1174 = vmax.f32 %v1105, 0.0
        %v1175 = vmax.f32 %v923, 0.0
        %v1176 = vmax.f32 %v925, 0.0
        %v1177 = vmax.f32 %v1016, 0.0
        %v1178 = vmax.f32 %v1018, 0.0
        %v1179 = vmax.f32 %v1109, 0.0
        %v1180 = vmax.f32 %v1111, 0.0
        %v1181 = vmax.f32 %v927, 0.0
        %v1182 = vmax.f32 %v929, 0.0
        %v1183 = vmax.f32 %v1020, 0.0
        %v1184 = vmax.f32 %v1022, 0.0
        %v1185 = vmax.f32 %v1113, 0.0
        %v1186 = vmax.f32 %v1115, 0.0
        %v1187 = vmax.f32 %v933, 0.0
        %v1188 = vmax.f32 %v935, 0.0
        %v1189 = vmax.f32 %v1026, 0.0
        %v1190 = vmax.f32 %v1028, 0.0
        %v1191 = vmax.f32 %v1119, 0.0
        %v1192 = vmax.f32 %v1121, 0.0
        %v1193 = vmax.f32 %v937, 0.0
        %v1194 = vmax.f32 %v939, 0.0
        %v1195 = vmax.f32 %v1030, 0.0
        %v1196 = vmax.f32 %v1032, 0.0
        %v1197 = vmax.f32 %v1123, 0.0
        %v1198 = vmax.f32 %v1125, 0.0
        %1199 = vrot.lane.b32.xlu0 %v1127, 127
        %v1200 = vpop.permute.xlu0 %1199
        %1201 = vrot.lane.b32.xlu0 %v1133, 127
        %v1202 = vpop.permute.xlu0 %1201
        %1203 = vrot.lane.b32.xlu0 %v1139, 127
        %v1204 = vpop.permute.xlu0 %1203
        %1205 = vrot.lane.b32.xlu0 %v1145, 127
        %v1206 = vpop.permute.xlu0 %1205
        %1207 = vrot.lane.b32.xlu0 %v1151, 127
        %v1208 = vpop.permute.xlu0 %1207
        %1209 = vrot.lane.b32.xlu0 %v1157, 127
        %v1210 = vpop.permute.xlu0 %1209
        %1211 = vrot.lane.b32.xlu0 %v1163, 127
        %v1212 = vpop.permute.xlu0 %1211
        %1213 = vrot.lane.b32.xlu0 %v1169, 127
        %v1214 = vpop.permute.xlu0 %1213
        %1215 = vrot.lane.b32.xlu0 %v1175, 127
        %v1216 = vpop.permute.xlu0 %1215
        %1217 = vrot.lane.b32.xlu0 %v1181, 127
        %v1218 = vpop.permute.xlu0 %1217
        %1219 = vrot.lane.b32.xlu0 %v1187, 127
        %v1220 = vpop.permute.xlu0 %1219
        %1221 = vrot.lane.b32.xlu0 %v1193, 127
        %v1222 = vpop.permute.xlu0 %1221
        %1223 = vrot.lane.b32.xlu0 %v1128, 127
        %v1224 = vpop.permute.xlu0 %1223
        %1225 = vrot.lane.b32.xlu0 %v1134, 127
        %v1226 = vpop.permute.xlu0 %1225
        %1227 = vrot.lane.b32.xlu0 %v1140, 127
        %v1228 = vpop.permute.xlu0 %1227
        %1229 = vrot.lane.b32.xlu0 %v1146, 127
        %v1230 = vpop.permute.xlu0 %1229
        %1231 = vrot.lane.b32.xlu0 %v1152, 127
        %v1232 = vpop.permute.xlu0 %1231
        %1233 = vrot.lane.b32.xlu0 %v1158, 127
        %v1234 = vpop.permute.xlu0 %1233
        %1235 = vrot.lane.b32.xlu0 %v1164, 127
        %v1236 = vpop.permute.xlu0 %1235
        %1237 = vrot.lane.b32.xlu0 %v1170, 127
        %v1238 = vpop.permute.xlu0 %1237
        %1239 = vrot.lane.b32.xlu0 %v1176, 127
        %v1240 = vpop.permute.xlu0 %1239
        %1241 = vrot.lane.b32.xlu0 %v1182, 127
        %v1242 = vpop.permute.xlu0 %1241
        %1243 = vrot.lane.b32.xlu0 %v1188, 127
        %v1244 = vpop.permute.xlu0 %1243
        %1245 = vrot.lane.b32.xlu0 %v1194, 127
        %v1246 = vpop.permute.xlu0 %1245
        %1247 = vrot.lane.b32.xlu0 %v1129, 127
        %v1248 = vpop.permute.xlu0 %1247
        %1249 = vrot.lane.b32.xlu0 %v1135, 127
        %v1250 = vpop.permute.xlu0 %1249
        %1251 = vrot.lane.b32.xlu0 %v1141, 127
        %v1252 = vpop.permute.xlu0 %1251
        %1253 = vrot.lane.b32.xlu0 %v1147, 127
        %v1254 = vpop.permute.xlu0 %1253
        %1255 = vrot.lane.b32.xlu0 %v1153, 127
        %v1256 = vpop.permute.xlu0 %1255
        %1257 = vrot.lane.b32.xlu0 %v1159, 127
        %v1258 = vpop.permute.xlu0 %1257
        %1259 = vrot.lane.b32.xlu0 %v1165, 127
        %v1260 = vpop.permute.xlu0 %1259
        %1261 = vrot.lane.b32.xlu0 %v1171, 127
        %v1262 = vpop.permute.xlu0 %1261
        %1263 = vrot.lane.b32.xlu0 %v1177, 127
        %v1264 = vpop.permute.xlu0 %1263
        %1265 = vrot.lane.b32.xlu0 %v1183, 127
        %v1266 = vpop.permute.xlu0 %1265
        %1267 = vrot.lane.b32.xlu0 %v1189, 127
        %v1268 = vpop.permute.xlu0 %1267
        %1269 = vrot.lane.b32.xlu0 %v1195, 127
        %v1270 = vpop.permute.xlu0 %1269
        %1271 = vrot.lane.b32.xlu0 %v1130, 127
        %v1272 = vpop.permute.xlu0 %1271
        %1273 = vrot.lane.b32.xlu0 %v1136, 127
        %v1274 = vpop.permute.xlu0 %1273
        %1275 = vrot.lane.b32.xlu0 %v1142, 127
        %v1276 = vpop.permute.xlu0 %1275
        %1277 = vrot.lane.b32.xlu0 %v1148, 127
        %v1278 = vpop.permute.xlu0 %1277
        %1279 = vrot.lane.b32.xlu0 %v1154, 127
        %v1280 = vpop.permute.xlu0 %1279
        %1281 = vrot.lane.b32.xlu0 %v1160, 127
        %v1282 = vpop.permute.xlu0 %1281
        %1283 = vrot.lane.b32.xlu0 %v1166, 127
        %v1284 = vpop.permute.xlu0 %1283
        %1285 = vrot.lane.b32.xlu0 %v1172, 127
        %v1286 = vpop.permute.xlu0 %1285
        %1287 = vrot.lane.b32.xlu0 %v1178, 127
        %v1288 = vpop.permute.xlu0 %1287
        %1289 = vrot.lane.b32.xlu0 %v1184, 127
        %v1290 = vpop.permute.xlu0 %1289
        %1291 = vrot.lane.b32.xlu0 %v1190, 127
        %v1292 = vpop.permute.xlu0 %1291
        %1293 = vrot.lane.b32.xlu0 %v1196, 127
        %v1294 = vpop.permute.xlu0 %1293
        %1295 = vrot.lane.b32.xlu0 %v1131, 127
        %v1296 = vpop.permute.xlu0 %1295
        %1297 = vrot.lane.b32.xlu0 %v1137, 127
        %v1298 = vpop.permute.xlu0 %1297
        %1299 = vrot.lane.b32.xlu0 %v1143, 127
        %v1300 = vpop.permute.xlu0 %1299
        %1301 = vrot.lane.b32.xlu0 %v1149, 127
        %v1302 = vpop.permute.xlu0 %1301
        %1303 = vrot.lane.b32.xlu0 %v1155, 127
        %v1304 = vpop.permute.xlu0 %1303
        %1305 = vrot.lane.b32.xlu0 %v1161, 127
        %v1306 = vpop.permute.xlu0 %1305
        %1307 = vrot.lane.b32.xlu0 %v1167, 127
        %v1308 = vpop.permute.xlu0 %1307
        %1309 = vrot.lane.b32.xlu0 %v1173, 127
        %v1310 = vpop.permute.xlu0 %1309
        %1311 = vrot.lane.b32.xlu0 %v1179, 127
        %v1312 = vpop.permute.xlu0 %1311
        %1313 = vrot.lane.b32.xlu0 %v1185, 127
        %v1314 = vpop.permute.xlu0 %1313
        %1315 = vrot.lane.b32.xlu0 %v1191, 127
        %v1316 = vpop.permute.xlu0 %1315
        %1317 = vrot.lane.b32.xlu0 %v1197, 127
        %v1318 = vpop.permute.xlu0 %1317
        %1319 = vrot.lane.b32.xlu0 %v1132, 127
        %v1320 = vpop.permute.xlu0 %1319
        %1321 = vrot.lane.b32.xlu0 %v1138, 127
        %v1322 = vpop.permute.xlu0 %1321
        %1323 = vrot.lane.b32.xlu0 %v1144, 127
        %v1324 = vpop.permute.xlu0 %1323
        %1325 = vrot.lane.b32.xlu0 %v1150, 127
        %v1326 = vpop.permute.xlu0 %1325
        %1327 = vrot.lane.b32.xlu0 %v1156, 127
        %v1328 = vpop.permute.xlu0 %1327
        %1329 = vrot.lane.b32.xlu0 %v1162, 127
        %v1330 = vpop.permute.xlu0 %1329
        %1331 = vrot.lane.b32.xlu0 %v1168, 127
        %v1332 = vpop.permute.xlu0 %1331
        %1333 = vrot.lane.b32.xlu0 %v1174, 127
        %v1334 = vpop.permute.xlu0 %1333
        %1335 = vrot.lane.b32.xlu0 %v1180, 127
        %v1336 = vpop.permute.xlu0 %1335
        %1337 = vrot.lane.b32.xlu0 %v1186, 127
        %v1338 = vpop.permute.xlu0 %1337
        %1339 = vrot.lane.b32.xlu0 %v1192, 127
        %v1340 = vpop.permute.xlu0 %1339
        %1341 = vrot.lane.b32.xlu0 %v1198, 127
        %v1342 = vpop.permute.xlu0 %1341
        %v1343 = vlaneseq
        %v1344 = vand.u32 %v1343, 127
        %vm1345 = vcmp.lt.s32.totalorder %v1344, 127
        %v1346 = vsel %vm1345, %v1296, %v1320
        %v1347 = vsel %vm1345, %v1298, %v1322
        %v1348 = vsel %vm1345, %v1300, %v1324
        %v1349 = vsel %vm1345, %v1302, %v1326
        %v1350 = vsel %vm1345, %v1304, %v1328
        %v1351 = vsel %vm1345, %v1306, %v1330
        %v1352 = vsel %vm1345, %v1308, %v1332
        %v1353 = vsel %vm1345, %v1310, %v1334
        %v1354 = vsel %vm1345, %v1312, %v1336
        %v1355 = vsel %vm1345, %v1314, %v1338
        %v1356 = vsel %vm1345, %v1316, %v1340
        %v1357 = vsel %vm1345, %v1318, %v1342
        %v1358 = vsel %vm1345, %v1272, %v1296
        %v1359 = vsel %vm1345, %v1274, %v1298
        %v1360 = vsel %vm1345, %v1276, %v1300
        %v1361 = vsel %vm1345, %v1278, %v1302
        %v1362 = vsel %vm1345, %v1280, %v1304
        %v1363 = vsel %vm1345, %v1282, %v1306
        %v1364 = vsel %vm1345, %v1284, %v1308
        %v1365 = vsel %vm1345, %v1286, %v1310
        %v1366 = vsel %vm1345, %v1288, %v1312
        %v1367 = vsel %vm1345, %v1290, %v1314
        %v1368 = vsel %vm1345, %v1292, %v1316
        %v1369 = vsel %vm1345, %v1294, %v1318
        %v1370 = vsel %vm1345, %v1248, %v1272
        %v1371 = vsel %vm1345, %v1250, %v1274
        %v1372 = vsel %vm1345, %v1252, %v1276
        %v1373 = vsel %vm1345, %v1254, %v1278
        %v1374 = vsel %vm1345, %v1256, %v1280
        %v1375 = vsel %vm1345, %v1258, %v1282
        %v1376 = vsel %vm1345, %v1260, %v1284
        %v1377 = vsel %vm1345, %v1262, %v1286
        %v1378 = vsel %vm1345, %v1264, %v1288
        %v1379 = vsel %vm1345, %v1266, %v1290
        %v1380 = vsel %vm1345, %v1268, %v1292
        %v1381 = vsel %vm1345, %v1270, %v1294
        %v1382 = vsel %vm1345, %v1224, %v1248
        %v1383 = vsel %vm1345, %v1226, %v1250
        %v1384 = vsel %vm1345, %v1228, %v1252
        %v1385 = vsel %vm1345, %v1230, %v1254
        %v1386 = vsel %vm1345, %v1232, %v1256
        %v1387 = vsel %vm1345, %v1234, %v1258
        %v1388 = vsel %vm1345, %v1236, %v1260
        %v1389 = vsel %vm1345, %v1238, %v1262
        %v1390 = vsel %vm1345, %v1240, %v1264
        %v1391 = vsel %vm1345, %v1242, %v1266
        %v1392 = vsel %vm1345, %v1244, %v1268
        %v1393 = vsel %vm1345, %v1246, %v1270
        %v1394 = vsel %vm1345, %v1200, %v1224
        %v1395 = vsel %vm1345, %v1202, %v1226
        %v1396 = vsel %vm1345, %v1204, %v1228
        %v1397 = vsel %vm1345, %v1206, %v1230
        %v1398 = vsel %vm1345, %v1208, %v1232
        %v1399 = vsel %vm1345, %v1210, %v1234
        %v1400 = vsel %vm1345, %v1212, %v1236
        %v1401 = vsel %vm1345, %v1214, %v1238
        %v1402 = vsel %vm1345, %v1216, %v1240
        %v1403 = vsel %vm1345, %v1218, %v1242
        %v1404 = vsel %vm1345, %v1220, %v1244
        %v1405 = vsel %vm1345, %v1222, %v1246
        %v1406 = vsel %vm1345, %v1320, %v1200
        %v1407 = vsel %vm1345, %v1322, %v1202
        %v1408 = vsel %vm1345, %v1324, %v1204
        %v1409 = vsel %vm1345, %v1326, %v1206
        %v1410 = vsel %vm1345, %v1328, %v1208
        %v1411 = vsel %vm1345, %v1330, %v1210
        %v1412 = vsel %vm1345, %v1332, %v1212
        %v1413 = vsel %vm1345, %v1334, %v1214
        %v1414 = vsel %vm1345, %v1336, %v1216
        %v1415 = vsel %vm1345, %v1338, %v1218
        %v1416 = vsel %vm1345, %v1340, %v1220
        %v1417 = vsel %vm1345, %v1342, %v1222
        %v1418 = vmax.f32 %v1127, %v1394
        %v1419 = vmax.f32 %v1128, %v1382
        %v1420 = vmax.f32 %v1129, %v1370
        %v1421 = vmax.f32 %v1130, %v1358
        %v1422 = vmax.f32 %v1131, %v1346
        %v1423 = vmax.f32 %v1132, %v1406
        %v1424 = vmax.f32 %v1133, %v1395
        %v1425 = vmax.f32 %v1134, %v1383
        %v1426 = vmax.f32 %v1135, %v1371
        %v1427 = vmax.f32 %v1136, %v1359
        %v1428 = vmax.f32 %v1137, %v1347
        %v1429 = vmax.f32 %v1138, %v1407
        %v1430 = vmax.f32 %v1139, %v1396
        %v1431 = vmax.f32 %v1140, %v1384
        %v1432 = vmax.f32 %v1141, %v1372
        %v1433 = vmax.f32 %v1142, %v1360
        %v1434 = vmax.f32 %v1143, %v1348
        %v1435 = vmax.f32 %v1144, %v1408
        %v1436 = vmax.f32 %v1145, %v1397
        %v1437 = vmax.f32 %v1146, %v1385
        %v1438 = vmax.f32 %v1147, %v1373
        %v1439 = vmax.f32 %v1148, %v1361
        %v1440 = vmax.f32 %v1149, %v1349
        %v1441 = vmax.f32 %v1150, %v1409
        %v1442 = vmax.f32 %v1151, %v1398
        %v1443 = vmax.f32 %v1152, %v1386
        %v1444 = vmax.f32 %v1153, %v1374
        %v1445 = vmax.f32 %v1154, %v1362
        %v1446 = vmax.f32 %v1155, %v1350
        %v1447 = vmax.f32 %v1156, %v1410
        %v1448 = vmax.f32 %v1157, %v1399
        %v1449 = vmax.f32 %v1158, %v1387
        %v1450 = vmax.f32 %v1159, %v1375
        %v1451 = vmax.f32 %v1160, %v1363
        %v1452 = vmax.f32 %v1161, %v1351
        %v1453 = vmax.f32 %v1162, %v1411
        %v1454 = vmax.f32 %v1163, %v1400
        %v1455 = vmax.f32 %v1164, %v1388
        %v1456 = vmax.f32 %v1165, %v1376
        %v1457 = vmax.f32 %v1166, %v1364
        %v1458 = vmax.f32 %v1167, %v1352
        %v1459 = vmax.f32 %v1168, %v1412
        %v1460 = vmax.f32 %v1169, %v1401
        %v1461 = vmax.f32 %v1170, %v1389
        %v1462 = vmax.f32 %v1171, %v1377
        %v1463 = vmax.f32 %v1172, %v1365
        %v1464 = vmax.f32 %v1173, %v1353
        %v1465 = vmax.f32 %v1174, %v1413
        %v1466 = vmax.f32 %v1175, %v1402
        %v1467 = vmax.f32 %v1176, %v1390
        %v1468 = vmax.f32 %v1177, %v1378
        %v1469 = vmax.f32 %v1178, %v1366
        %v1470 = vmax.f32 %v1179, %v1354
        %v1471 = vmax.f32 %v1180, %v1414
        %v1472 = vmax.f32 %v1181, %v1403
        %v1473 = vmax.f32 %v1182, %v1391
        %v1474 = vmax.f32 %v1183, %v1379
        %v1475 = vmax.f32 %v1184, %v1367
        %v1476 = vmax.f32 %v1185, %v1355
        %v1477 = vmax.f32 %v1186, %v1415
        %v1478 = vmax.f32 %v1187, %v1404
        %v1479 = vmax.f32 %v1188, %v1392
        %v1480 = vmax.f32 %v1189, %v1380
        %v1481 = vmax.f32 %v1190, %v1368
        %v1482 = vmax.f32 %v1191, %v1356
        %v1483 = vmax.f32 %v1192, %v1416
        %v1484 = vmax.f32 %v1193, %v1405
        %v1485 = vmax.f32 %v1194, %v1393
        %v1486 = vmax.f32 %v1195, %v1381
        %v1487 = vmax.f32 %v1196, %v1369
        %v1488 = vmax.f32 %v1197, %v1357
        %v1489 = vmax.f32 %v1198, %v1417
        %1490 = vrot.lane.b32.xlu0 %v1127, 126
        %v1491 = vpop.permute.xlu0 %1490
        %1492 = vrot.lane.b32.xlu0 %v1133, 126
        %v1493 = vpop.permute.xlu0 %1492
        %1494 = vrot.lane.b32.xlu0 %v1139, 126
        %v1495 = vpop.permute.xlu0 %1494
        %1496 = vrot.lane.b32.xlu0 %v1145, 126
        %v1497 = vpop.permute.xlu0 %1496
        %1498 = vrot.lane.b32.xlu0 %v1151, 126
        %v1499 = vpop.permute.xlu0 %1498
        %1500 = vrot.lane.b32.xlu0 %v1157, 126
        %v1501 = vpop.permute.xlu0 %1500
        %1502 = vrot.lane.b32.xlu0 %v1163, 126
        %v1503 = vpop.permute.xlu0 %1502
        %1504 = vrot.lane.b32.xlu0 %v1169, 126
        %v1505 = vpop.permute.xlu0 %1504
        %1506 = vrot.lane.b32.xlu0 %v1175, 126
        %v1507 = vpop.permute.xlu0 %1506
        %1508 = vrot.lane.b32.xlu0 %v1181, 126
        %v1509 = vpop.permute.xlu0 %1508
        %1510 = vrot.lane.b32.xlu0 %v1187, 126
        %v1511 = vpop.permute.xlu0 %1510
        %1512 = vrot.lane.b32.xlu0 %v1193, 126
        %v1513 = vpop.permute.xlu0 %1512
        %1514 = vrot.lane.b32.xlu0 %v1128, 126
        %v1515 = vpop.permute.xlu0 %1514
        %1516 = vrot.lane.b32.xlu0 %v1134, 126
        %v1517 = vpop.permute.xlu0 %1516
        %1518 = vrot.lane.b32.xlu0 %v1140, 126
        %v1519 = vpop.permute.xlu0 %1518
        %1520 = vrot.lane.b32.xlu0 %v1146, 126
        %v1521 = vpop.permute.xlu0 %1520
        %1522 = vrot.lane.b32.xlu0 %v1152, 126
        %v1523 = vpop.permute.xlu0 %1522
        %1524 = vrot.lane.b32.xlu0 %v1158, 126
        %v1525 = vpop.permute.xlu0 %1524
        %1526 = vrot.lane.b32.xlu0 %v1164, 126
        %v1527 = vpop.permute.xlu0 %1526
        %1528 = vrot.lane.b32.xlu0 %v1170, 126
        %v1529 = vpop.permute.xlu0 %1528
        %1530 = vrot.lane.b32.xlu0 %v1176, 126
        %v1531 = vpop.permute.xlu0 %1530
        %1532 = vrot.lane.b32.xlu0 %v1182, 126
        %v1533 = vpop.permute.xlu0 %1532
        %1534 = vrot.lane.b32.xlu0 %v1188, 126
        %v1535 = vpop.permute.xlu0 %1534
        %1536 = vrot.lane.b32.xlu0 %v1194, 126
        %v1537 = vpop.permute.xlu0 %1536
        %1538 = vrot.lane.b32.xlu0 %v1129, 126
        %v1539 = vpop.permute.xlu0 %1538
        %1540 = vrot.lane.b32.xlu0 %v1135, 126
        %v1541 = vpop.permute.xlu0 %1540
        %1542 = vrot.lane.b32.xlu0 %v1141, 126
        %v1543 = vpop.permute.xlu0 %1542
        %1544 = vrot.lane.b32.xlu0 %v1147, 126
        %v1545 = vpop.permute.xlu0 %1544
        %1546 = vrot.lane.b32.xlu0 %v1153, 126
        %v1547 = vpop.permute.xlu0 %1546
        %1548 = vrot.lane.b32.xlu0 %v1159, 126
        %v1549 = vpop.permute.xlu0 %1548
        %1550 = vrot.lane.b32.xlu0 %v1165, 126
        %v1551 = vpop.permute.xlu0 %1550
        %1552 = vrot.lane.b32.xlu0 %v1171, 126
        %v1553 = vpop.permute.xlu0 %1552
        %1554 = vrot.lane.b32.xlu0 %v1177, 126
        %v1555 = vpop.permute.xlu0 %1554
        %1556 = vrot.lane.b32.xlu0 %v1183, 126
        %v1557 = vpop.permute.xlu0 %1556
        %1558 = vrot.lane.b32.xlu0 %v1189, 126
        %v1559 = vpop.permute.xlu0 %1558
        %1560 = vrot.lane.b32.xlu0 %v1195, 126
        %v1561 = vpop.permute.xlu0 %1560
        %1562 = vrot.lane.b32.xlu0 %v1130, 126
        %v1563 = vpop.permute.xlu0 %1562
        %1564 = vrot.lane.b32.xlu0 %v1136, 126
        %v1565 = vpop.permute.xlu0 %1564
        %1566 = vrot.lane.b32.xlu0 %v1142, 126
        %v1567 = vpop.permute.xlu0 %1566
        %1568 = vrot.lane.b32.xlu0 %v1148, 126
        %v1569 = vpop.permute.xlu0 %1568
        %1570 = vrot.lane.b32.xlu0 %v1154, 126
        %v1571 = vpop.permute.xlu0 %1570
        %1572 = vrot.lane.b32.xlu0 %v1160, 126
        %v1573 = vpop.permute.xlu0 %1572
        %1574 = vrot.lane.b32.xlu0 %v1166, 126
        %v1575 = vpop.permute.xlu0 %1574
        %1576 = vrot.lane.b32.xlu0 %v1172, 126
        %v1577 = vpop.permute.xlu0 %1576
        %1578 = vrot.lane.b32.xlu0 %v1178, 126
        %v1579 = vpop.permute.xlu0 %1578
        %1580 = vrot.lane.b32.xlu0 %v1184, 126
        %v1581 = vpop.permute.xlu0 %1580
        %1582 = vrot.lane.b32.xlu0 %v1190, 126
        %v1583 = vpop.permute.xlu0 %1582
        %1584 = vrot.lane.b32.xlu0 %v1196, 126
        %v1585 = vpop.permute.xlu0 %1584
        %1586 = vrot.lane.b32.xlu0 %v1131, 126
        %v1587 = vpop.permute.xlu0 %1586
        %1588 = vrot.lane.b32.xlu0 %v1137, 126
        %v1589 = vpop.permute.xlu0 %1588
        %1590 = vrot.lane.b32.xlu0 %v1143, 126
        %v1591 = vpop.permute.xlu0 %1590
        %1592 = vrot.lane.b32.xlu0 %v1149, 126
        %v1593 = vpop.permute.xlu0 %1592
        %1594 = vrot.lane.b32.xlu0 %v1155, 126
        %v1595 = vpop.permute.xlu0 %1594
        %1596 = vrot.lane.b32.xlu0 %v1161, 126
        %v1597 = vpop.permute.xlu0 %1596
        %1598 = vrot.lane.b32.xlu0 %v1167, 126
        %v1599 = vpop.permute.xlu0 %1598
        %1600 = vrot.lane.b32.xlu0 %v1173, 126
        %v1601 = vpop.permute.xlu0 %1600
        %1602 = vrot.lane.b32.xlu0 %v1179, 126
        %v1603 = vpop.permute.xlu0 %1602
        %1604 = vrot.lane.b32.xlu0 %v1185, 126
        %v1605 = vpop.permute.xlu0 %1604
        %1606 = vrot.lane.b32.xlu0 %v1191, 126
        %v1607 = vpop.permute.xlu0 %1606
        %1608 = vrot.lane.b32.xlu0 %v1197, 126
        %v1609 = vpop.permute.xlu0 %1608
        %1610 = vrot.lane.b32.xlu0 %v1132, 126
        %v1611 = vpop.permute.xlu0 %1610
        %1612 = vrot.lane.b32.xlu0 %v1138, 126
        %v1613 = vpop.permute.xlu0 %1612
        %1614 = vrot.lane.b32.xlu0 %v1144, 126
        %v1615 = vpop.permute.xlu0 %1614
        %1616 = vrot.lane.b32.xlu0 %v1150, 126
        %v1617 = vpop.permute.xlu0 %1616
        %1618 = vrot.lane.b32.xlu0 %v1156, 126
        %v1619 = vpop.permute.xlu0 %1618
        %1620 = vrot.lane.b32.xlu0 %v1162, 126
        %v1621 = vpop.permute.xlu0 %1620
        %1622 = vrot.lane.b32.xlu0 %v1168, 126
        %v1623 = vpop.permute.xlu0 %1622
        %1624 = vrot.lane.b32.xlu0 %v1174, 126
        %v1625 = vpop.permute.xlu0 %1624
        %1626 = vrot.lane.b32.xlu0 %v1180, 126
        %v1627 = vpop.permute.xlu0 %1626
        %1628 = vrot.lane.b32.xlu0 %v1186, 126
        %v1629 = vpop.permute.xlu0 %1628
        %1630 = vrot.lane.b32.xlu0 %v1192, 126
        %v1631 = vpop.permute.xlu0 %1630
        %1632 = vrot.lane.b32.xlu0 %v1198, 126
        %v1633 = vpop.permute.xlu0 %1632
        %vm1634 = vcmp.lt.s32.totalorder %v1344, 126
        %v1635 = vsel %vm1634, %v1587, %v1611
        %v1636 = vsel %vm1634, %v1589, %v1613
        %v1637 = vsel %vm1634, %v1591, %v1615
        %v1638 = vsel %vm1634, %v1593, %v1617
        %v1639 = vsel %vm1634, %v1595, %v1619
        %v1640 = vsel %vm1634, %v1597, %v1621
        %v1641 = vsel %vm1634, %v1599, %v1623
        %v1642 = vsel %vm1634, %v1601, %v1625
        %v1643 = vsel %vm1634, %v1603, %v1627
        %v1644 = vsel %vm1634, %v1605, %v1629
        %v1645 = vsel %vm1634, %v1607, %v1631
        %v1646 = vsel %vm1634, %v1609, %v1633
        %v1647 = vsel %vm1634, %v1563, %v1587
        %v1648 = vsel %vm1634, %v1565, %v1589
        %v1649 = vsel %vm1634, %v1567, %v1591
        %v1650 = vsel %vm1634, %v1569, %v1593
        %v1651 = vsel %vm1634, %v1571, %v1595
        %v1652 = vsel %vm1634, %v1573, %v1597
        %v1653 = vsel %vm1634, %v1575, %v1599
        %v1654 = vsel %vm1634, %v1577, %v1601
        %v1655 = vsel %vm1634, %v1579, %v1603
        %v1656 = vsel %vm1634, %v1581, %v1605
        %v1657 = vsel %vm1634, %v1583, %v1607
        %v1658 = vsel %vm1634, %v1585, %v1609
        %v1659 = vsel %vm1634, %v1539, %v1563
        %v1660 = vsel %vm1634, %v1541, %v1565
        %v1661 = vsel %vm1634, %v1543, %v1567
        %v1662 = vsel %vm1634, %v1545, %v1569
        %v1663 = vsel %vm1634, %v1547, %v1571
        %v1664 = vsel %vm1634, %v1549, %v1573
        %v1665 = vsel %vm1634, %v1551, %v1575
        %v1666 = vsel %vm1634, %v1553, %v1577
        %v1667 = vsel %vm1634, %v1555, %v1579
        %v1668 = vsel %vm1634, %v1557, %v1581
        %v1669 = vsel %vm1634, %v1559, %v1583
        %v1670 = vsel %vm1634, %v1561, %v1585
        %v1671 = vsel %vm1634, %v1515, %v1539
        %v1672 = vsel %vm1634, %v1517, %v1541
        %v1673 = vsel %vm1634, %v1519, %v1543
        %v1674 = vsel %vm1634, %v1521, %v1545
        %v1675 = vsel %vm1634, %v1523, %v1547
        %v1676 = vsel %vm1634, %v1525, %v1549
        %v1677 = vsel %vm1634, %v1527, %v1551
        %v1678 = vsel %vm1634, %v1529, %v1553
        %v1679 = vsel %vm1634, %v1531, %v1555
        %v1680 = vsel %vm1634, %v1533, %v1557
        %v1681 = vsel %vm1634, %v1535, %v1559
        %v1682 = vsel %vm1634, %v1537, %v1561
        %v1683 = vsel %vm1634, %v1491, %v1515
        %v1684 = vsel %vm1634, %v1493, %v1517
        %v1685 = vsel %vm1634, %v1495, %v1519
        %v1686 = vsel %vm1634, %v1497, %v1521
        %v1687 = vsel %vm1634, %v1499, %v1523
        %v1688 = vsel %vm1634, %v1501, %v1525
        %v1689 = vsel %vm1634, %v1503, %v1527
        %v1690 = vsel %vm1634, %v1505, %v1529
        %v1691 = vsel %vm1634, %v1507, %v1531
        %v1692 = vsel %vm1634, %v1509, %v1533
        %v1693 = vsel %vm1634, %v1511, %v1535
        %v1694 = vsel %vm1634, %v1513, %v1537
        %v1695 = vsel %vm1634, %v1611, %v1491
        %v1696 = vsel %vm1634, %v1613, %v1493
        %v1697 = vsel %vm1634, %v1615, %v1495
        %v1698 = vsel %vm1634, %v1617, %v1497
        %v1699 = vsel %vm1634, %v1619, %v1499
        %v1700 = vsel %vm1634, %v1621, %v1501
        %v1701 = vsel %vm1634, %v1623, %v1503
        %v1702 = vsel %vm1634, %v1625, %v1505
        %v1703 = vsel %vm1634, %v1627, %v1507
        %v1704 = vsel %vm1634, %v1629, %v1509
        %v1705 = vsel %vm1634, %v1631, %v1511
        %v1706 = vsel %vm1634, %v1633, %v1513
        %v1707 = vmax.f32 %v1418, %v1683
        %v1708 = vmax.f32 %v1419, %v1671
        %v1709 = vmax.f32 %v1420, %v1659
        %v1710 = vmax.f32 %v1421, %v1647
        %v1711 = vmax.f32 %v1422, %v1635
        %v1712 = vmax.f32 %v1423, %v1695
        %v1713 = vmax.f32 %v1424, %v1684
        %v1714 = vmax.f32 %v1425, %v1672
        %v1715 = vmax.f32 %v1426, %v1660
        %v1716 = vmax.f32 %v1427, %v1648
        %v1717 = vmax.f32 %v1428, %v1636
        %v1718 = vmax.f32 %v1429, %v1696
        %v1719 = vmax.f32 %v1430, %v1685
        %v1720 = vmax.f32 %v1431, %v1673
        %v1721 = vmax.f32 %v1432, %v1661
        %v1722 = vmax.f32 %v1433, %v1649
        %v1723 = vmax.f32 %v1434, %v1637
        %v1724 = vmax.f32 %v1435, %v1697
        %v1725 = vmax.f32 %v1436, %v1686
        %v1726 = vmax.f32 %v1437, %v1674
        %v1727 = vmax.f32 %v1438, %v1662
        %v1728 = vmax.f32 %v1439, %v1650
        %v1729 = vmax.f32 %v1440, %v1638
        %v1730 = vmax.f32 %v1441, %v1698
        %v1731 = vmax.f32 %v1442, %v1687
        %v1732 = vmax.f32 %v1443, %v1675
        %v1733 = vmax.f32 %v1444, %v1663
        %v1734 = vmax.f32 %v1445, %v1651
        %v1735 = vmax.f32 %v1446, %v1639
        %v1736 = vmax.f32 %v1447, %v1699
        %v1737 = vmax.f32 %v1448, %v1688
        %v1738 = vmax.f32 %v1449, %v1676
        %v1739 = vmax.f32 %v1450, %v1664
        %v1740 = vmax.f32 %v1451, %v1652
        %v1741 = vmax.f32 %v1452, %v1640
        %v1742 = vmax.f32 %v1453, %v1700
        %v1743 = vmax.f32 %v1454, %v1689
        %v1744 = vmax.f32 %v1455, %v1677
        %v1745 = vmax.f32 %v1456, %v1665
        %v1746 = vmax.f32 %v1457, %v1653
        %v1747 = vmax.f32 %v1458, %v1641
        %v1748 = vmax.f32 %v1459, %v1701
        %v1749 = vmax.f32 %v1460, %v1690
        %v1750 = vmax.f32 %v1461, %v1678
        %v1751 = vmax.f32 %v1462, %v1666
        %v1752 = vmax.f32 %v1463, %v1654
        %v1753 = vmax.f32 %v1464, %v1642
        %v1754 = vmax.f32 %v1465, %v1702
        %v1755 = vmax.f32 %v1466, %v1691
        %v1756 = vmax.f32 %v1467, %v1679
        %v1757 = vmax.f32 %v1468, %v1667
        %v1758 = vmax.f32 %v1469, %v1655
        %v1759 = vmax.f32 %v1470, %v1643
        %v1760 = vmax.f32 %v1471, %v1703
        %v1761 = vmax.f32 %v1472, %v1692
        %v1762 = vmax.f32 %v1473, %v1680
        %v1763 = vmax.f32 %v1474, %v1668
        %v1764 = vmax.f32 %v1475, %v1656
        %v1765 = vmax.f32 %v1476, %v1644
        %v1766 = vmax.f32 %v1477, %v1704
        %v1767 = vmax.f32 %v1478, %v1693
        %v1768 = vmax.f32 %v1479, %v1681
        %v1769 = vmax.f32 %v1480, %v1669
        %v1770 = vmax.f32 %v1481, %v1657
        %v1771 = vmax.f32 %v1482, %v1645
        %v1772 = vmax.f32 %v1483, %v1705
        %v1773 = vmax.f32 %v1484, %v1694
        %v1774 = vmax.f32 %v1485, %v1682
        %v1775 = vmax.f32 %v1486, %v1670
        %v1776 = vmax.f32 %v1487, %v1658
        %v1777 = vmax.f32 %v1488, %v1646
        %v1778 = vmax.f32 %v1489, %v1706
        %1779 = vrot.lane.b32.xlu0 %v1127, 125
        %v1780 = vpop.permute.xlu0 %1779
        %1781 = vrot.lane.b32.xlu0 %v1133, 125
        %v1782 = vpop.permute.xlu0 %1781
        %1783 = vrot.lane.b32.xlu0 %v1139, 125
        %v1784 = vpop.permute.xlu0 %1783
        %1785 = vrot.lane.b32.xlu0 %v1145, 125
        %v1786 = vpop.permute.xlu0 %1785
        %1787 = vrot.lane.b32.xlu0 %v1151, 125
        %v1788 = vpop.permute.xlu0 %1787
        %1789 = vrot.lane.b32.xlu0 %v1157, 125
        %v1790 = vpop.permute.xlu0 %1789
        %1791 = vrot.lane.b32.xlu0 %v1163, 125
        %v1792 = vpop.permute.xlu0 %1791
        %1793 = vrot.lane.b32.xlu0 %v1169, 125
        %v1794 = vpop.permute.xlu0 %1793
        %1795 = vrot.lane.b32.xlu0 %v1175, 125
        %v1796 = vpop.permute.xlu0 %1795
        %1797 = vrot.lane.b32.xlu0 %v1181, 125
        %v1798 = vpop.permute.xlu0 %1797
        %1799 = vrot.lane.b32.xlu0 %v1187, 125
        %v1800 = vpop.permute.xlu0 %1799
        %1801 = vrot.lane.b32.xlu0 %v1193, 125
        %v1802 = vpop.permute.xlu0 %1801
        %1803 = vrot.lane.b32.xlu0 %v1128, 125
        %v1804 = vpop.permute.xlu0 %1803
        %1805 = vrot.lane.b32.xlu0 %v1134, 125
        %v1806 = vpop.permute.xlu0 %1805
        %1807 = vrot.lane.b32.xlu0 %v1140, 125
        %v1808 = vpop.permute.xlu0 %1807
        %1809 = vrot.lane.b32.xlu0 %v1146, 125
        %v1810 = vpop.permute.xlu0 %1809
        %1811 = vrot.lane.b32.xlu0 %v1152, 125
        %v1812 = vpop.permute.xlu0 %1811
        %1813 = vrot.lane.b32.xlu0 %v1158, 125
        %v1814 = vpop.permute.xlu0 %1813
        %1815 = vrot.lane.b32.xlu0 %v1164, 125
        %v1816 = vpop.permute.xlu0 %1815
        %1817 = vrot.lane.b32.xlu0 %v1170, 125
        %v1818 = vpop.permute.xlu0 %1817
        %1819 = vrot.lane.b32.xlu0 %v1176, 125
        %v1820 = vpop.permute.xlu0 %1819
        %1821 = vrot.lane.b32.xlu0 %v1182, 125
        %v1822 = vpop.permute.xlu0 %1821
        %1823 = vrot.lane.b32.xlu0 %v1188, 125
        %v1824 = vpop.permute.xlu0 %1823
        %1825 = vrot.lane.b32.xlu0 %v1194, 125
        %v1826 = vpop.permute.xlu0 %1825
        %1827 = vrot.lane.b32.xlu0 %v1129, 125
        %v1828 = vpop.permute.xlu0 %1827
        %1829 = vrot.lane.b32.xlu0 %v1135, 125
        %v1830 = vpop.permute.xlu0 %1829
        %1831 = vrot.lane.b32.xlu0 %v1141, 125
        %v1832 = vpop.permute.xlu0 %1831
        %1833 = vrot.lane.b32.xlu0 %v1147, 125
        %v1834 = vpop.permute.xlu0 %1833
        %1835 = vrot.lane.b32.xlu0 %v1153, 125
        %v1836 = vpop.permute.xlu0 %1835
        %1837 = vrot.lane.b32.xlu0 %v1159, 125
        %v1838 = vpop.permute.xlu0 %1837
        %1839 = vrot.lane.b32.xlu0 %v1165, 125
        %v1840 = vpop.permute.xlu0 %1839
        %1841 = vrot.lane.b32.xlu0 %v1171, 125
        %v1842 = vpop.permute.xlu0 %1841
        %1843 = vrot.lane.b32.xlu0 %v1177, 125
        %v1844 = vpop.permute.xlu0 %1843
        %1845 = vrot.lane.b32.xlu0 %v1183, 125
        %v1846 = vpop.permute.xlu0 %1845
        %1847 = vrot.lane.b32.xlu0 %v1189, 125
        %v1848 = vpop.permute.xlu0 %1847
        %1849 = vrot.lane.b32.xlu0 %v1195, 125
        %v1850 = vpop.permute.xlu0 %1849
        %1851 = vrot.lane.b32.xlu0 %v1130, 125
        %v1852 = vpop.permute.xlu0 %1851
        %1853 = vrot.lane.b32.xlu0 %v1136, 125
        %v1854 = vpop.permute.xlu0 %1853
        %1855 = vrot.lane.b32.xlu0 %v1142, 125
        %v1856 = vpop.permute.xlu0 %1855
        %1857 = vrot.lane.b32.xlu0 %v1148, 125
        %v1858 = vpop.permute.xlu0 %1857
        %1859 = vrot.lane.b32.xlu0 %v1154, 125
        %v1860 = vpop.permute.xlu0 %1859
        %1861 = vrot.lane.b32.xlu0 %v1160, 125
        %v1862 = vpop.permute.xlu0 %1861
        %1863 = vrot.lane.b32.xlu0 %v1166, 125
        %v1864 = vpop.permute.xlu0 %1863
        %1865 = vrot.lane.b32.xlu0 %v1172, 125
        %v1866 = vpop.permute.xlu0 %1865
        %1867 = vrot.lane.b32.xlu0 %v1178, 125
        %v1868 = vpop.permute.xlu0 %1867
        %1869 = vrot.lane.b32.xlu0 %v1184, 125
        %v1870 = vpop.permute.xlu0 %1869
        %1871 = vrot.lane.b32.xlu0 %v1190, 125
        %v1872 = vpop.permute.xlu0 %1871
        %1873 = vrot.lane.b32.xlu0 %v1196, 125
        %v1874 = vpop.permute.xlu0 %1873
        %1875 = vrot.lane.b32.xlu0 %v1131, 125
        %v1876 = vpop.permute.xlu0 %1875
        %1877 = vrot.lane.b32.xlu0 %v1137, 125
        %v1878 = vpop.permute.xlu0 %1877
        %1879 = vrot.lane.b32.xlu0 %v1143, 125
        %v1880 = vpop.permute.xlu0 %1879
        %1881 = vrot.lane.b32.xlu0 %v1149, 125
        %v1882 = vpop.permute.xlu0 %1881
        %1883 = vrot.lane.b32.xlu0 %v1155, 125
        %v1884 = vpop.permute.xlu0 %1883
        %1885 = vrot.lane.b32.xlu0 %v1161, 125
        %v1886 = vpop.permute.xlu0 %1885
        %1887 = vrot.lane.b32.xlu0 %v1167, 125
        %v1888 = vpop.permute.xlu0 %1887
        %1889 = vrot.lane.b32.xlu0 %v1173, 125
        %v1890 = vpop.permute.xlu0 %1889
        %1891 = vrot.lane.b32.xlu0 %v1179, 125
        %v1892 = vpop.permute.xlu0 %1891
        %1893 = vrot.lane.b32.xlu0 %v1185, 125
        %v1894 = vpop.permute.xlu0 %1893
        %1895 = vrot.lane.b32.xlu0 %v1191, 125
        %v1896 = vpop.permute.xlu0 %1895
        %1897 = vrot.lane.b32.xlu0 %v1197, 125
        %v1898 = vpop.permute.xlu0 %1897
        %1899 = vrot.lane.b32.xlu0 %v1132, 125
        %v1900 = vpop.permute.xlu0 %1899
        %1901 = vrot.lane.b32.xlu0 %v1138, 125
        %v1902 = vpop.permute.xlu0 %1901
        %1903 = vrot.lane.b32.xlu0 %v1144, 125
        %v1904 = vpop.permute.xlu0 %1903
        %1905 = vrot.lane.b32.xlu0 %v1150, 125
        %v1906 = vpop.permute.xlu0 %1905
        %1907 = vrot.lane.b32.xlu0 %v1156, 125
        %v1908 = vpop.permute.xlu0 %1907
        %1909 = vrot.lane.b32.xlu0 %v1162, 125
        %v1910 = vpop.permute.xlu0 %1909
        %1911 = vrot.lane.b32.xlu0 %v1168, 125
        %v1912 = vpop.permute.xlu0 %1911
        %1913 = vrot.lane.b32.xlu0 %v1174, 125
        %v1914 = vpop.permute.xlu0 %1913
        %1915 = vrot.lane.b32.xlu0 %v1180, 125
        %v1916 = vpop.permute.xlu0 %1915
        %1917 = vrot.lane.b32.xlu0 %v1186, 125
        %v1918 = vpop.permute.xlu0 %1917
        %1919 = vrot.lane.b32.xlu0 %v1192, 125
        %v1920 = vpop.permute.xlu0 %1919
        %1921 = vrot.lane.b32.xlu0 %v1198, 125
        %v1922 = vpop.permute.xlu0 %1921
        %vm1923 = vcmp.lt.s32.totalorder %v1344, 125
        %v1924 = vsel %vm1923, %v1876, %v1900
        %v1925 = vsel %vm1923, %v1878, %v1902
        %v1926 = vsel %vm1923, %v1880, %v1904
        %v1927 = vsel %vm1923, %v1882, %v1906
        %v1928 = vsel %vm1923, %v1884, %v1908
        %v1929 = vsel %vm1923, %v1886, %v1910
        %v1930 = vsel %vm1923, %v1888, %v1912
        %v1931 = vsel %vm1923, %v1890, %v1914
        %v1932 = vsel %vm1923, %v1892, %v1916
        %v1933 = vsel %vm1923, %v1894, %v1918
        %v1934 = vsel %vm1923, %v1896, %v1920
        %v1935 = vsel %vm1923, %v1898, %v1922
        %v1936 = vsel %vm1923, %v1852, %v1876
        %v1937 = vsel %vm1923, %v1854, %v1878
        %v1938 = vsel %vm1923, %v1856, %v1880
        %v1939 = vsel %vm1923, %v1858, %v1882
        %v1940 = vsel %vm1923, %v1860, %v1884
        %v1941 = vsel %vm1923, %v1862, %v1886
        %v1942 = vsel %vm1923, %v1864, %v1888
        %v1943 = vsel %vm1923, %v1866, %v1890
        %v1944 = vsel %vm1923, %v1868, %v1892
        %v1945 = vsel %vm1923, %v1870, %v1894
        %v1946 = vsel %vm1923, %v1872, %v1896
        %v1947 = vsel %vm1923, %v1874, %v1898
        %v1948 = vsel %vm1923, %v1828, %v1852
        %v1949 = vsel %vm1923, %v1830, %v1854
        %v1950 = vsel %vm1923, %v1832, %v1856
        %v1951 = vsel %vm1923, %v1834, %v1858
        %v1952 = vsel %vm1923, %v1836, %v1860
        %v1953 = vsel %vm1923, %v1838, %v1862
        %v1954 = vsel %vm1923, %v1840, %v1864
        %v1955 = vsel %vm1923, %v1842, %v1866
        %v1956 = vsel %vm1923, %v1844, %v1868
        %v1957 = vsel %vm1923, %v1846, %v1870
        %v1958 = vsel %vm1923, %v1848, %v1872
        %v1959 = vsel %vm1923, %v1850, %v1874
        %v1960 = vsel %vm1923, %v1804, %v1828
        %v1961 = vsel %vm1923, %v1806, %v1830
        %v1962 = vsel %vm1923, %v1808, %v1832
        %v1963 = vsel %vm1923, %v1810, %v1834
        %v1964 = vsel %vm1923, %v1812, %v1836
        %v1965 = vsel %vm1923, %v1814, %v1838
        %v1966 = vsel %vm1923, %v1816, %v1840
        %v1967 = vsel %vm1923, %v1818, %v1842
        %v1968 = vsel %vm1923, %v1820, %v1844
        %v1969 = vsel %vm1923, %v1822, %v1846
        %v1970 = vsel %vm1923, %v1824, %v1848
        %v1971 = vsel %vm1923, %v1826, %v1850
        %v1972 = vsel %vm1923, %v1780, %v1804
        %v1973 = vsel %vm1923, %v1782, %v1806
        %v1974 = vsel %vm1923, %v1784, %v1808
        %v1975 = vsel %vm1923, %v1786, %v1810
        %v1976 = vsel %vm1923, %v1788, %v1812
        %v1977 = vsel %vm1923, %v1790, %v1814
        %v1978 = vsel %vm1923, %v1792, %v1816
        %v1979 = vsel %vm1923, %v1794, %v1818
        %v1980 = vsel %vm1923, %v1796, %v1820
        %v1981 = vsel %vm1923, %v1798, %v1822
        %v1982 = vsel %vm1923, %v1800, %v1824
        %v1983 = vsel %vm1923, %v1802, %v1826
        %v1984 = vsel %vm1923, %v1900, %v1780
        %v1985 = vsel %vm1923, %v1902, %v1782
        %v1986 = vsel %vm1923, %v1904, %v1784
        %v1987 = vsel %vm1923, %v1906, %v1786
        %v1988 = vsel %vm1923, %v1908, %v1788
        %v1989 = vsel %vm1923, %v1910, %v1790
        %v1990 = vsel %vm1923, %v1912, %v1792
        %v1991 = vsel %vm1923, %v1914, %v1794
        %v1992 = vsel %vm1923, %v1916, %v1796
        %v1993 = vsel %vm1923, %v1918, %v1798
        %v1994 = vsel %vm1923, %v1920, %v1800
        %v1995 = vsel %vm1923, %v1922, %v1802
        %v1996 = vmax.f32 %v1707, %v1972
        %v1997 = vmax.f32 %v1708, %v1960
        %v1998 = vmax.f32 %v1709, %v1948
        %v1999 = vmax.f32 %v1710, %v1936
        %v2000 = vmax.f32 %v1711, %v1924
        %v2001 = vmax.f32 %v1712, %v1984
        %v2002 = vmax.f32 %v1713, %v1973
        %v2003 = vmax.f32 %v1714, %v1961
        %v2004 = vmax.f32 %v1715, %v1949
        %v2005 = vmax.f32 %v1716, %v1937
        %v2006 = vmax.f32 %v1717, %v1925
        %v2007 = vmax.f32 %v1718, %v1985
        %v2008 = vmax.f32 %v1719, %v1974
        %v2009 = vmax.f32 %v1720, %v1962
        %v2010 = vmax.f32 %v1721, %v1950
        %v2011 = vmax.f32 %v1722, %v1938
        %v2012 = vmax.f32 %v1723, %v1926
        %v2013 = vmax.f32 %v1724, %v1986
        %v2014 = vmax.f32 %v1725, %v1975
        %v2015 = vmax.f32 %v1726, %v1963
        %v2016 = vmax.f32 %v1727, %v1951
        %v2017 = vmax.f32 %v1728, %v1939
        %v2018 = vmax.f32 %v1729, %v1927
        %v2019 = vmax.f32 %v1730, %v1987
        %v2020 = vmax.f32 %v1731, %v1976
        %v2021 = vmax.f32 %v1732, %v1964
        %v2022 = vmax.f32 %v1733, %v1952
        %v2023 = vmax.f32 %v1734, %v1940
        %v2024 = vmax.f32 %v1735, %v1928
        %v2025 = vmax.f32 %v1736, %v1988
        %v2026 = vmax.f32 %v1737, %v1977
        %v2027 = vmax.f32 %v1738, %v1965
        %v2028 = vmax.f32 %v1739, %v1953
        %v2029 = vmax.f32 %v1740, %v1941
        %v2030 = vmax.f32 %v1741, %v1929
        %v2031 = vmax.f32 %v1742, %v1989
        %v2032 = vmax.f32 %v1743, %v1978
        %v2033 = vmax.f32 %v1744, %v1966
        %v2034 = vmax.f32 %v1745, %v1954
        %v2035 = vmax.f32 %v1746, %v1942
        %v2036 = vmax.f32 %v1747, %v1930
        %v2037 = vmax.f32 %v1748, %v1990
        %v2038 = vmax.f32 %v1749, %v1979
        %v2039 = vmax.f32 %v1750, %v1967
        %v2040 = vmax.f32 %v1751, %v1955
        %v2041 = vmax.f32 %v1752, %v1943
        %v2042 = vmax.f32 %v1753, %v1931
        %v2043 = vmax.f32 %v1754, %v1991
        %v2044 = vmax.f32 %v1755, %v1980
        %v2045 = vmax.f32 %v1756, %v1968
        %v2046 = vmax.f32 %v1757, %v1956
        %v2047 = vmax.f32 %v1758, %v1944
        %v2048 = vmax.f32 %v1759, %v1932
        %v2049 = vmax.f32 %v1760, %v1992
        %v2050 = vmax.f32 %v1761, %v1981
        %v2051 = vmax.f32 %v1762, %v1969
        %v2052 = vmax.f32 %v1763, %v1957
        %v2053 = vmax.f32 %v1764, %v1945
        %v2054 = vmax.f32 %v1765, %v1933
        %v2055 = vmax.f32 %v1766, %v1993
        %v2056 = vmax.f32 %v1767, %v1982
        %v2057 = vmax.f32 %v1768, %v1970
        %v2058 = vmax.f32 %v1769, %v1958
        %v2059 = vmax.f32 %v1770, %v1946
        %v2060 = vmax.f32 %v1771, %v1934
        %v2061 = vmax.f32 %v1772, %v1994
        %v2062 = vmax.f32 %v1773, %v1983
        %v2063 = vmax.f32 %v1774, %v1971
        %v2064 = vmax.f32 %v1775, %v1959
        %v2065 = vmax.f32 %v1776, %v1947
        %v2066 = vmax.f32 %v1777, %v1935
        %v2067 = vmax.f32 %v1778, %v1995
        %2068 = vrot.lane.b32.xlu0 %v1127, 124
        %v2069 = vpop.permute.xlu0 %2068
        %2070 = vrot.lane.b32.xlu0 %v1133, 124
        %v2071 = vpop.permute.xlu0 %2070
        %2072 = vrot.lane.b32.xlu0 %v1139, 124
        %v2073 = vpop.permute.xlu0 %2072
        %2074 = vrot.lane.b32.xlu0 %v1145, 124
        %v2075 = vpop.permute.xlu0 %2074
        %2076 = vrot.lane.b32.xlu0 %v1151, 124
        %v2077 = vpop.permute.xlu0 %2076
        %2078 = vrot.lane.b32.xlu0 %v1157, 124
        %v2079 = vpop.permute.xlu0 %2078
        %2080 = vrot.lane.b32.xlu0 %v1163, 124
        %v2081 = vpop.permute.xlu0 %2080
        %2082 = vrot.lane.b32.xlu0 %v1169, 124
        %v2083 = vpop.permute.xlu0 %2082
        %2084 = vrot.lane.b32.xlu0 %v1175, 124
        %v2085 = vpop.permute.xlu0 %2084
        %2086 = vrot.lane.b32.xlu0 %v1181, 124
        %v2087 = vpop.permute.xlu0 %2086
        %2088 = vrot.lane.b32.xlu0 %v1187, 124
        %v2089 = vpop.permute.xlu0 %2088
        %2090 = vrot.lane.b32.xlu0 %v1193, 124
        %v2091 = vpop.permute.xlu0 %2090
        %2092 = vrot.lane.b32.xlu0 %v1128, 124
        %v2093 = vpop.permute.xlu0 %2092
        %2094 = vrot.lane.b32.xlu0 %v1134, 124
        %v2095 = vpop.permute.xlu0 %2094
        %2096 = vrot.lane.b32.xlu0 %v1140, 124
        %v2097 = vpop.permute.xlu0 %2096
        %2098 = vrot.lane.b32.xlu0 %v1146, 124
        %v2099 = vpop.permute.xlu0 %2098
        %2100 = vrot.lane.b32.xlu0 %v1152, 124
        %v2101 = vpop.permute.xlu0 %2100
        %2102 = vrot.lane.b32.xlu0 %v1158, 124
        %v2103 = vpop.permute.xlu0 %2102
        %2104 = vrot.lane.b32.xlu0 %v1164, 124
        %v2105 = vpop.permute.xlu0 %2104
        %2106 = vrot.lane.b32.xlu0 %v1170, 124
        %v2107 = vpop.permute.xlu0 %2106
        %2108 = vrot.lane.b32.xlu0 %v1176, 124
        %v2109 = vpop.permute.xlu0 %2108
        %2110 = vrot.lane.b32.xlu0 %v1182, 124
        %v2111 = vpop.permute.xlu0 %2110
        %2112 = vrot.lane.b32.xlu0 %v1188, 124
        %v2113 = vpop.permute.xlu0 %2112
        %2114 = vrot.lane.b32.xlu0 %v1194, 124
        %v2115 = vpop.permute.xlu0 %2114
        %2116 = vrot.lane.b32.xlu0 %v1129, 124
        %v2117 = vpop.permute.xlu0 %2116
        %2118 = vrot.lane.b32.xlu0 %v1135, 124
        %v2119 = vpop.permute.xlu0 %2118
        %2120 = vrot.lane.b32.xlu0 %v1141, 124
        %v2121 = vpop.permute.xlu0 %2120
        %2122 = vrot.lane.b32.xlu0 %v1147, 124
        %v2123 = vpop.permute.xlu0 %2122
        %2124 = vrot.lane.b32.xlu0 %v1153, 124
        %v2125 = vpop.permute.xlu0 %2124
        %2126 = vrot.lane.b32.xlu0 %v1159, 124
        %v2127 = vpop.permute.xlu0 %2126
        %2128 = vrot.lane.b32.xlu0 %v1165, 124
        %v2129 = vpop.permute.xlu0 %2128
        %2130 = vrot.lane.b32.xlu0 %v1171, 124
        %v2131 = vpop.permute.xlu0 %2130
        %2132 = vrot.lane.b32.xlu0 %v1177, 124
        %v2133 = vpop.permute.xlu0 %2132
        %2134 = vrot.lane.b32.xlu0 %v1183, 124
        %v2135 = vpop.permute.xlu0 %2134
        %2136 = vrot.lane.b32.xlu0 %v1189, 124
        %v2137 = vpop.permute.xlu0 %2136
        %2138 = vrot.lane.b32.xlu0 %v1195, 124
        %v2139 = vpop.permute.xlu0 %2138
        %2140 = vrot.lane.b32.xlu0 %v1130, 124
        %v2141 = vpop.permute.xlu0 %2140
        %2142 = vrot.lane.b32.xlu0 %v1136, 124
        %v2143 = vpop.permute.xlu0 %2142
        %2144 = vrot.lane.b32.xlu0 %v1142, 124
        %v2145 = vpop.permute.xlu0 %2144
        %2146 = vrot.lane.b32.xlu0 %v1148, 124
        %v2147 = vpop.permute.xlu0 %2146
        %2148 = vrot.lane.b32.xlu0 %v1154, 124
        %v2149 = vpop.permute.xlu0 %2148
        %2150 = vrot.lane.b32.xlu0 %v1160, 124
        %v2151 = vpop.permute.xlu0 %2150
        %2152 = vrot.lane.b32.xlu0 %v1166, 124
        %v2153 = vpop.permute.xlu0 %2152
        %2154 = vrot.lane.b32.xlu0 %v1172, 124
        %v2155 = vpop.permute.xlu0 %2154
        %2156 = vrot.lane.b32.xlu0 %v1178, 124
        %v2157 = vpop.permute.xlu0 %2156
        %2158 = vrot.lane.b32.xlu0 %v1184, 124
        %v2159 = vpop.permute.xlu0 %2158
        %2160 = vrot.lane.b32.xlu0 %v1190, 124
        %v2161 = vpop.permute.xlu0 %2160
        %2162 = vrot.lane.b32.xlu0 %v1196, 124
        %v2163 = vpop.permute.xlu0 %2162
        %2164 = vrot.lane.b32.xlu0 %v1131, 124
        %v2165 = vpop.permute.xlu0 %2164
        %2166 = vrot.lane.b32.xlu0 %v1137, 124
        %v2167 = vpop.permute.xlu0 %2166
        %2168 = vrot.lane.b32.xlu0 %v1143, 124
        %v2169 = vpop.permute.xlu0 %2168
        %2170 = vrot.lane.b32.xlu0 %v1149, 124
        %v2171 = vpop.permute.xlu0 %2170
        %2172 = vrot.lane.b32.xlu0 %v1155, 124
        %v2173 = vpop.permute.xlu0 %2172
        %2174 = vrot.lane.b32.xlu0 %v1161, 124
        %v2175 = vpop.permute.xlu0 %2174
        %2176 = vrot.lane.b32.xlu0 %v1167, 124
        %v2177 = vpop.permute.xlu0 %2176
        %2178 = vrot.lane.b32.xlu0 %v1173, 124
        %v2179 = vpop.permute.xlu0 %2178
        %2180 = vrot.lane.b32.xlu0 %v1179, 124
        %v2181 = vpop.permute.xlu0 %2180
        %2182 = vrot.lane.b32.xlu0 %v1185, 124
        %v2183 = vpop.permute.xlu0 %2182
        %2184 = vrot.lane.b32.xlu0 %v1191, 124
        %v2185 = vpop.permute.xlu0 %2184
        %2186 = vrot.lane.b32.xlu0 %v1197, 124
        %v2187 = vpop.permute.xlu0 %2186
        %2188 = vrot.lane.b32.xlu0 %v1132, 124
        %v2189 = vpop.permute.xlu0 %2188
        %2190 = vrot.lane.b32.xlu0 %v1138, 124
        %v2191 = vpop.permute.xlu0 %2190
        %2192 = vrot.lane.b32.xlu0 %v1144, 124
        %v2193 = vpop.permute.xlu0 %2192
        %2194 = vrot.lane.b32.xlu0 %v1150, 124
        %v2195 = vpop.permute.xlu0 %2194
        %2196 = vrot.lane.b32.xlu0 %v1156, 124
        %v2197 = vpop.permute.xlu0 %2196
        %2198 = vrot.lane.b32.xlu0 %v1162, 124
        %v2199 = vpop.permute.xlu0 %2198
        %2200 = vrot.lane.b32.xlu0 %v1168, 124
        %v2201 = vpop.permute.xlu0 %2200
        %2202 = vrot.lane.b32.xlu0 %v1174, 124
        %v2203 = vpop.permute.xlu0 %2202
        %2204 = vrot.lane.b32.xlu0 %v1180, 124
        %v2205 = vpop.permute.xlu0 %2204
        %2206 = vrot.lane.b32.xlu0 %v1186, 124
        %v2207 = vpop.permute.xlu0 %2206
        %2208 = vrot.lane.b32.xlu0 %v1192, 124
        %v2209 = vpop.permute.xlu0 %2208
        %2210 = vrot.lane.b32.xlu0 %v1198, 124
        %v2211 = vpop.permute.xlu0 %2210
        %vm2212 = vcmp.lt.s32.totalorder %v1344, 124
        %v2213 = vsel %vm2212, %v2165, %v2189
        %v2214 = vsel %vm2212, %v2167, %v2191
        %v2215 = vsel %vm2212, %v2169, %v2193
        %v2216 = vsel %vm2212, %v2171, %v2195
        %v2217 = vsel %vm2212, %v2173, %v2197
        %v2218 = vsel %vm2212, %v2175, %v2199
        %v2219 = vsel %vm2212, %v2177, %v2201
        %v2220 = vsel %vm2212, %v2179, %v2203
        %v2221 = vsel %vm2212, %v2181, %v2205
        %v2222 = vsel %vm2212, %v2183, %v2207
        %v2223 = vsel %vm2212, %v2185, %v2209
        %v2224 = vsel %vm2212, %v2187, %v2211
        %v2225 = vsel %vm2212, %v2141, %v2165
        %v2226 = vsel %vm2212, %v2143, %v2167
        %v2227 = vsel %vm2212, %v2145, %v2169
        %v2228 = vsel %vm2212, %v2147, %v2171
        %v2229 = vsel %vm2212, %v2149, %v2173
        %v2230 = vsel %vm2212, %v2151, %v2175
        %v2231 = vsel %vm2212, %v2153, %v2177
        %v2232 = vsel %vm2212, %v2155, %v2179
        %v2233 = vsel %vm2212, %v2157, %v2181
        %v2234 = vsel %vm2212, %v2159, %v2183
        %v2235 = vsel %vm2212, %v2161, %v2185
        %v2236 = vsel %vm2212, %v2163, %v2187
        %v2237 = vsel %vm2212, %v2117, %v2141
        %v2238 = vsel %vm2212, %v2119, %v2143
        %v2239 = vsel %vm2212, %v2121, %v2145
        %v2240 = vsel %vm2212, %v2123, %v2147
        %v2241 = vsel %vm2212, %v2125, %v2149
        %v2242 = vsel %vm2212, %v2127, %v2151
        %v2243 = vsel %vm2212, %v2129, %v2153
        %v2244 = vsel %vm2212, %v2131, %v2155
        %v2245 = vsel %vm2212, %v2133, %v2157
        %v2246 = vsel %vm2212, %v2135, %v2159
        %v2247 = vsel %vm2212, %v2137, %v2161
        %v2248 = vsel %vm2212, %v2139, %v2163
        %v2249 = vsel %vm2212, %v2093, %v2117
        %v2250 = vsel %vm2212, %v2095, %v2119
        %v2251 = vsel %vm2212, %v2097, %v2121
        %v2252 = vsel %vm2212, %v2099, %v2123
        %v2253 = vsel %vm2212, %v2101, %v2125
        %v2254 = vsel %vm2212, %v2103, %v2127
        %v2255 = vsel %vm2212, %v2105, %v2129
        %v2256 = vsel %vm2212, %v2107, %v2131
        %v2257 = vsel %vm2212, %v2109, %v2133
        %v2258 = vsel %vm2212, %v2111, %v2135
        %v2259 = vsel %vm2212, %v2113, %v2137
        %v2260 = vsel %vm2212, %v2115, %v2139
        %v2261 = vsel %vm2212, %v2069, %v2093
        %v2262 = vsel %vm2212, %v2071, %v2095
        %v2263 = vsel %vm2212, %v2073, %v2097
        %v2264 = vsel %vm2212, %v2075, %v2099
        %v2265 = vsel %vm2212, %v2077, %v2101
        %v2266 = vsel %vm2212, %v2079, %v2103
        %v2267 = vsel %vm2212, %v2081, %v2105
        %v2268 = vsel %vm2212, %v2083, %v2107
        %v2269 = vsel %vm2212, %v2085, %v2109
        %v2270 = vsel %vm2212, %v2087, %v2111
        %v2271 = vsel %vm2212, %v2089, %v2113
        %v2272 = vsel %vm2212, %v2091, %v2115
        %v2273 = vsel %vm2212, %v2189, %v2069
        %v2274 = vsel %vm2212, %v2191, %v2071
        %v2275 = vsel %vm2212, %v2193, %v2073
        %v2276 = vsel %vm2212, %v2195, %v2075
        %v2277 = vsel %vm2212, %v2197, %v2077
        %v2278 = vsel %vm2212, %v2199, %v2079
        %v2279 = vsel %vm2212, %v2201, %v2081
        %v2280 = vsel %vm2212, %v2203, %v2083
        %v2281 = vsel %vm2212, %v2205, %v2085
        %v2282 = vsel %vm2212, %v2207, %v2087
        %v2283 = vsel %vm2212, %v2209, %v2089
        %v2284 = vsel %vm2212, %v2211, %v2091
        %v2285 = vmax.f32 %v1996, %v2261
        %v2286 = vmax.f32 %v1997, %v2249
        %v2287 = vmax.f32 %v1998, %v2237
        %v2288 = vmax.f32 %v1999, %v2225
        %v2289 = vmax.f32 %v2000, %v2213
        %v2290 = vmax.f32 %v2001, %v2273
        %v2291 = vmax.f32 %v2002, %v2262
        %v2292 = vmax.f32 %v2003, %v2250
        %v2293 = vmax.f32 %v2004, %v2238
        %v2294 = vmax.f32 %v2005, %v2226
        %v2295 = vmax.f32 %v2006, %v2214
        %v2296 = vmax.f32 %v2007, %v2274
        %v2297 = vmax.f32 %v2008, %v2263
        %v2298 = vmax.f32 %v2009, %v2251
        %v2299 = vmax.f32 %v2010, %v2239
        %v2300 = vmax.f32 %v2011, %v2227
        %v2301 = vmax.f32 %v2012, %v2215
        %v2302 = vmax.f32 %v2013, %v2275
        %v2303 = vmax.f32 %v2014, %v2264
        %v2304 = vmax.f32 %v2015, %v2252
        %v2305 = vmax.f32 %v2016, %v2240
        %v2306 = vmax.f32 %v2017, %v2228
        %v2307 = vmax.f32 %v2018, %v2216
        %v2308 = vmax.f32 %v2019, %v2276
        %v2309 = vmax.f32 %v2020, %v2265
        %v2310 = vmax.f32 %v2021, %v2253
        %v2311 = vmax.f32 %v2022, %v2241
        %v2312 = vmax.f32 %v2023, %v2229
        %v2313 = vmax.f32 %v2024, %v2217
        %v2314 = vmax.f32 %v2025, %v2277
        %v2315 = vmax.f32 %v2026, %v2266
        %v2316 = vmax.f32 %v2027, %v2254
        %v2317 = vmax.f32 %v2028, %v2242
        %v2318 = vmax.f32 %v2029, %v2230
        %v2319 = vmax.f32 %v2030, %v2218
        %v2320 = vmax.f32 %v2031, %v2278
        %v2321 = vmax.f32 %v2032, %v2267
        %v2322 = vmax.f32 %v2033, %v2255
        %v2323 = vmax.f32 %v2034, %v2243
        %v2324 = vmax.f32 %v2035, %v2231
        %v2325 = vmax.f32 %v2036, %v2219
        %v2326 = vmax.f32 %v2037, %v2279
        %v2327 = vmax.f32 %v2038, %v2268
        %v2328 = vmax.f32 %v2039, %v2256
        %v2329 = vmax.f32 %v2040, %v2244
        %v2330 = vmax.f32 %v2041, %v2232
        %v2331 = vmax.f32 %v2042, %v2220
        %v2332 = vmax.f32 %v2043, %v2280
        %v2333 = vmax.f32 %v2044, %v2269
        %v2334 = vmax.f32 %v2045, %v2257
        %v2335 = vmax.f32 %v2046, %v2245
        %v2336 = vmax.f32 %v2047, %v2233
        %v2337 = vmax.f32 %v2048, %v2221
        %v2338 = vmax.f32 %v2049, %v2281
        %v2339 = vmax.f32 %v2050, %v2270
        %v2340 = vmax.f32 %v2051, %v2258
        %v2341 = vmax.f32 %v2052, %v2246
        %v2342 = vmax.f32 %v2053, %v2234
        %v2343 = vmax.f32 %v2054, %v2222
        %v2344 = vmax.f32 %v2055, %v2282
        %v2345 = vmax.f32 %v2056, %v2271
        %v2346 = vmax.f32 %v2057, %v2259
        %v2347 = vmax.f32 %v2058, %v2247
        %v2348 = vmax.f32 %v2059, %v2235
        %v2349 = vmax.f32 %v2060, %v2223
        %v2350 = vmax.f32 %v2061, %v2283
        %v2351 = vmax.f32 %v2062, %v2272
        %v2352 = vmax.f32 %v2063, %v2260
        %v2353 = vmax.f32 %v2064, %v2248
        %v2354 = vmax.f32 %v2065, %v2236
        %v2355 = vmax.f32 %v2066, %v2224
        %v2356 = vmax.f32 %v2067, %v2284
        %2357 = vrot.lane.b32.xlu0 %v1127, 123
        %v2358 = vpop.permute.xlu0 %2357
        %2359 = vrot.lane.b32.xlu0 %v1133, 123
        %v2360 = vpop.permute.xlu0 %2359
        %2361 = vrot.lane.b32.xlu0 %v1139, 123
        %v2362 = vpop.permute.xlu0 %2361
        %2363 = vrot.lane.b32.xlu0 %v1145, 123
        %v2364 = vpop.permute.xlu0 %2363
        %2365 = vrot.lane.b32.xlu0 %v1151, 123
        %v2366 = vpop.permute.xlu0 %2365
        %2367 = vrot.lane.b32.xlu0 %v1157, 123
        %v2368 = vpop.permute.xlu0 %2367
        %2369 = vrot.lane.b32.xlu0 %v1163, 123
        %v2370 = vpop.permute.xlu0 %2369
        %2371 = vrot.lane.b32.xlu0 %v1169, 123
        %v2372 = vpop.permute.xlu0 %2371
        %2373 = vrot.lane.b32.xlu0 %v1175, 123
        %v2374 = vpop.permute.xlu0 %2373
        %2375 = vrot.lane.b32.xlu0 %v1181, 123
        %v2376 = vpop.permute.xlu0 %2375
        %2377 = vrot.lane.b32.xlu0 %v1187, 123
        %v2378 = vpop.permute.xlu0 %2377
        %2379 = vrot.lane.b32.xlu0 %v1193, 123
        %v2380 = vpop.permute.xlu0 %2379
        %2381 = vrot.lane.b32.xlu0 %v1128, 123
        %v2382 = vpop.permute.xlu0 %2381
        %2383 = vrot.lane.b32.xlu0 %v1134, 123
        %v2384 = vpop.permute.xlu0 %2383
        %2385 = vrot.lane.b32.xlu0 %v1140, 123
        %v2386 = vpop.permute.xlu0 %2385
        %2387 = vrot.lane.b32.xlu0 %v1146, 123
        %v2388 = vpop.permute.xlu0 %2387
        %2389 = vrot.lane.b32.xlu0 %v1152, 123
        %v2390 = vpop.permute.xlu0 %2389
        %2391 = vrot.lane.b32.xlu0 %v1158, 123
        %v2392 = vpop.permute.xlu0 %2391
        %2393 = vrot.lane.b32.xlu0 %v1164, 123
        %v2394 = vpop.permute.xlu0 %2393
        %2395 = vrot.lane.b32.xlu0 %v1170, 123
        %v2396 = vpop.permute.xlu0 %2395
        %2397 = vrot.lane.b32.xlu0 %v1176, 123
        %v2398 = vpop.permute.xlu0 %2397
        %2399 = vrot.lane.b32.xlu0 %v1182, 123
        %v2400 = vpop.permute.xlu0 %2399
        %2401 = vrot.lane.b32.xlu0 %v1188, 123
        %v2402 = vpop.permute.xlu0 %2401
        %2403 = vrot.lane.b32.xlu0 %v1194, 123
        %v2404 = vpop.permute.xlu0 %2403
        %2405 = vrot.lane.b32.xlu0 %v1129, 123
        %v2406 = vpop.permute.xlu0 %2405
        %2407 = vrot.lane.b32.xlu0 %v1135, 123
        %v2408 = vpop.permute.xlu0 %2407
        %2409 = vrot.lane.b32.xlu0 %v1141, 123
        %v2410 = vpop.permute.xlu0 %2409
        %2411 = vrot.lane.b32.xlu0 %v1147, 123
        %v2412 = vpop.permute.xlu0 %2411
        %2413 = vrot.lane.b32.xlu0 %v1153, 123
        %v2414 = vpop.permute.xlu0 %2413
        %2415 = vrot.lane.b32.xlu0 %v1159, 123
        %v2416 = vpop.permute.xlu0 %2415
        %2417 = vrot.lane.b32.xlu0 %v1165, 123
        %v2418 = vpop.permute.xlu0 %2417
        %2419 = vrot.lane.b32.xlu0 %v1171, 123
        %v2420 = vpop.permute.xlu0 %2419
        %2421 = vrot.lane.b32.xlu0 %v1177, 123
        %v2422 = vpop.permute.xlu0 %2421
        %2423 = vrot.lane.b32.xlu0 %v1183, 123
        %v2424 = vpop.permute.xlu0 %2423
        %2425 = vrot.lane.b32.xlu0 %v1189, 123
        %v2426 = vpop.permute.xlu0 %2425
        %2427 = vrot.lane.b32.xlu0 %v1195, 123
        %v2428 = vpop.permute.xlu0 %2427
        %2429 = vrot.lane.b32.xlu0 %v1130, 123
        %v2430 = vpop.permute.xlu0 %2429
        %2431 = vrot.lane.b32.xlu0 %v1136, 123
        %v2432 = vpop.permute.xlu0 %2431
        %2433 = vrot.lane.b32.xlu0 %v1142, 123
        %v2434 = vpop.permute.xlu0 %2433
        %2435 = vrot.lane.b32.xlu0 %v1148, 123
        %v2436 = vpop.permute.xlu0 %2435
        %2437 = vrot.lane.b32.xlu0 %v1154, 123
        %v2438 = vpop.permute.xlu0 %2437
        %2439 = vrot.lane.b32.xlu0 %v1160, 123
        %v2440 = vpop.permute.xlu0 %2439
        %2441 = vrot.lane.b32.xlu0 %v1166, 123
        %v2442 = vpop.permute.xlu0 %2441
        %2443 = vrot.lane.b32.xlu0 %v1172, 123
        %v2444 = vpop.permute.xlu0 %2443
        %2445 = vrot.lane.b32.xlu0 %v1178, 123
        %v2446 = vpop.permute.xlu0 %2445
        %2447 = vrot.lane.b32.xlu0 %v1184, 123
        %v2448 = vpop.permute.xlu0 %2447
        %2449 = vrot.lane.b32.xlu0 %v1190, 123
        %v2450 = vpop.permute.xlu0 %2449
        %2451 = vrot.lane.b32.xlu0 %v1196, 123
        %v2452 = vpop.permute.xlu0 %2451
        %2453 = vrot.lane.b32.xlu0 %v1131, 123
        %v2454 = vpop.permute.xlu0 %2453
        %2455 = vrot.lane.b32.xlu0 %v1137, 123
        %v2456 = vpop.permute.xlu0 %2455
        %2457 = vrot.lane.b32.xlu0 %v1143, 123
        %v2458 = vpop.permute.xlu0 %2457
        %2459 = vrot.lane.b32.xlu0 %v1149, 123
        %v2460 = vpop.permute.xlu0 %2459
        %2461 = vrot.lane.b32.xlu0 %v1155, 123
        %v2462 = vpop.permute.xlu0 %2461
        %2463 = vrot.lane.b32.xlu0 %v1161, 123
        %v2464 = vpop.permute.xlu0 %2463
        %2465 = vrot.lane.b32.xlu0 %v1167, 123
        %v2466 = vpop.permute.xlu0 %2465
        %2467 = vrot.lane.b32.xlu0 %v1173, 123
        %v2468 = vpop.permute.xlu0 %2467
        %2469 = vrot.lane.b32.xlu0 %v1179, 123
        %v2470 = vpop.permute.xlu0 %2469
        %2471 = vrot.lane.b32.xlu0 %v1185, 123
        %v2472 = vpop.permute.xlu0 %2471
        %2473 = vrot.lane.b32.xlu0 %v1191, 123
        %v2474 = vpop.permute.xlu0 %2473
        %2475 = vrot.lane.b32.xlu0 %v1197, 123
        %v2476 = vpop.permute.xlu0 %2475
        %2477 = vrot.lane.b32.xlu0 %v1132, 123
        %v2478 = vpop.permute.xlu0 %2477
        %2479 = vrot.lane.b32.xlu0 %v1138, 123
        %v2480 = vpop.permute.xlu0 %2479
        %2481 = vrot.lane.b32.xlu0 %v1144, 123
        %v2482 = vpop.permute.xlu0 %2481
        %2483 = vrot.lane.b32.xlu0 %v1150, 123
        %v2484 = vpop.permute.xlu0 %2483
        %2485 = vrot.lane.b32.xlu0 %v1156, 123
        %v2486 = vpop.permute.xlu0 %2485
        %2487 = vrot.lane.b32.xlu0 %v1162, 123
        %v2488 = vpop.permute.xlu0 %2487
        %2489 = vrot.lane.b32.xlu0 %v1168, 123
        %v2490 = vpop.permute.xlu0 %2489
        %2491 = vrot.lane.b32.xlu0 %v1174, 123
        %v2492 = vpop.permute.xlu0 %2491
        %2493 = vrot.lane.b32.xlu0 %v1180, 123
        %v2494 = vpop.permute.xlu0 %2493
        %2495 = vrot.lane.b32.xlu0 %v1186, 123
        %v2496 = vpop.permute.xlu0 %2495
        %2497 = vrot.lane.b32.xlu0 %v1192, 123
        %v2498 = vpop.permute.xlu0 %2497
        %2499 = vrot.lane.b32.xlu0 %v1198, 123
        %v2500 = vpop.permute.xlu0 %2499
        %vm2501 = vcmp.lt.s32.totalorder %v1344, 123
        %v2502 = vsel %vm2501, %v2454, %v2478
        %v2503 = vsel %vm2501, %v2456, %v2480
        %v2504 = vsel %vm2501, %v2458, %v2482
        %v2505 = vsel %vm2501, %v2460, %v2484
        %v2506 = vsel %vm2501, %v2462, %v2486
        %v2507 = vsel %vm2501, %v2464, %v2488
        %v2508 = vsel %vm2501, %v2466, %v2490
        %v2509 = vsel %vm2501, %v2468, %v2492
        %v2510 = vsel %vm2501, %v2470, %v2494
        %v2511 = vsel %vm2501, %v2472, %v2496
        %v2512 = vsel %vm2501, %v2474, %v2498
        %v2513 = vsel %vm2501, %v2476, %v2500
        %v2514 = vsel %vm2501, %v2430, %v2454
        %v2515 = vsel %vm2501, %v2432, %v2456
        %v2516 = vsel %vm2501, %v2434, %v2458
        %v2517 = vsel %vm2501, %v2436, %v2460
        %v2518 = vsel %vm2501, %v2438, %v2462
        %v2519 = vsel %vm2501, %v2440, %v2464
        %v2520 = vsel %vm2501, %v2442, %v2466
        %v2521 = vsel %vm2501, %v2444, %v2468
        %v2522 = vsel %vm2501, %v2446, %v2470
        %v2523 = vsel %vm2501, %v2448, %v2472
        %v2524 = vsel %vm2501, %v2450, %v2474
        %v2525 = vsel %vm2501, %v2452, %v2476
        %v2526 = vsel %vm2501, %v2406, %v2430
        %v2527 = vsel %vm2501, %v2408, %v2432
        %v2528 = vsel %vm2501, %v2410, %v2434
        %v2529 = vsel %vm2501, %v2412, %v2436
        %v2530 = vsel %vm2501, %v2414, %v2438
        %v2531 = vsel %vm2501, %v2416, %v2440
        %v2532 = vsel %vm2501, %v2418, %v2442
        %v2533 = vsel %vm2501, %v2420, %v2444
        %v2534 = vsel %vm2501, %v2422, %v2446
        %v2535 = vsel %vm2501, %v2424, %v2448
        %v2536 = vsel %vm2501, %v2426, %v2450
        %v2537 = vsel %vm2501, %v2428, %v2452
        %v2538 = vsel %vm2501, %v2382, %v2406
        %v2539 = vsel %vm2501, %v2384, %v2408
        %v2540 = vsel %vm2501, %v2386, %v2410
        %v2541 = vsel %vm2501, %v2388, %v2412
        %v2542 = vsel %vm2501, %v2390, %v2414
        %v2543 = vsel %vm2501, %v2392, %v2416
        %v2544 = vsel %vm2501, %v2394, %v2418
        %v2545 = vsel %vm2501, %v2396, %v2420
        %v2546 = vsel %vm2501, %v2398, %v2422
        %v2547 = vsel %vm2501, %v2400, %v2424
        %v2548 = vsel %vm2501, %v2402, %v2426
        %v2549 = vsel %vm2501, %v2404, %v2428
        %v2550 = vsel %vm2501, %v2358, %v2382
        %v2551 = vsel %vm2501, %v2360, %v2384
        %v2552 = vsel %vm2501, %v2362, %v2386
        %v2553 = vsel %vm2501, %v2364, %v2388
        %v2554 = vsel %vm2501, %v2366, %v2390
        %v2555 = vsel %vm2501, %v2368, %v2392
        %v2556 = vsel %vm2501, %v2370, %v2394
        %v2557 = vsel %vm2501, %v2372, %v2396
        %v2558 = vsel %vm2501, %v2374, %v2398
        %v2559 = vsel %vm2501, %v2376, %v2400
        %v2560 = vsel %vm2501, %v2378, %v2402
        %v2561 = vsel %vm2501, %v2380, %v2404
        %v2562 = vsel %vm2501, %v2478, %v2358
        %v2563 = vsel %vm2501, %v2480, %v2360
        %v2564 = vsel %vm2501, %v2482, %v2362
        %v2565 = vsel %vm2501, %v2484, %v2364
        %v2566 = vsel %vm2501, %v2486, %v2366
        %v2567 = vsel %vm2501, %v2488, %v2368
        %v2568 = vsel %vm2501, %v2490, %v2370
        %v2569 = vsel %vm2501, %v2492, %v2372
        %v2570 = vsel %vm2501, %v2494, %v2374
        %v2571 = vsel %vm2501, %v2496, %v2376
        %v2572 = vsel %vm2501, %v2498, %v2378
        %v2573 = vsel %vm2501, %v2500, %v2380
        %v2574 = vmax.f32 %v2285, %v2550
        %v2575 = vmax.f32 %v2286, %v2538
        %v2576 = vmax.f32 %v2287, %v2526
        %v2577 = vmax.f32 %v2288, %v2514
        %v2578 = vmax.f32 %v2289, %v2502
        %v2579 = vmax.f32 %v2290, %v2562
        %v2580 = vmax.f32 %v2291, %v2551
        %v2581 = vmax.f32 %v2292, %v2539
        %v2582 = vmax.f32 %v2293, %v2527
        %v2583 = vmax.f32 %v2294, %v2515
        %v2584 = vmax.f32 %v2295, %v2503
        %v2585 = vmax.f32 %v2296, %v2563
        %v2586 = vmax.f32 %v2297, %v2552
        %v2587 = vmax.f32 %v2298, %v2540
        %v2588 = vmax.f32 %v2299, %v2528
        %v2589 = vmax.f32 %v2300, %v2516
        %v2590 = vmax.f32 %v2301, %v2504
        %v2591 = vmax.f32 %v2302, %v2564
        %v2592 = vmax.f32 %v2303, %v2553
        %v2593 = vmax.f32 %v2304, %v2541
        %v2594 = vmax.f32 %v2305, %v2529
        %v2595 = vmax.f32 %v2306, %v2517
        %v2596 = vmax.f32 %v2307, %v2505
        %v2597 = vmax.f32 %v2308, %v2565
        %v2598 = vmax.f32 %v2309, %v2554
        %v2599 = vmax.f32 %v2310, %v2542
        %v2600 = vmax.f32 %v2311, %v2530
        %v2601 = vmax.f32 %v2312, %v2518
        %v2602 = vmax.f32 %v2313, %v2506
        %v2603 = vmax.f32 %v2314, %v2566
        %v2604 = vmax.f32 %v2315, %v2555
        %v2605 = vmax.f32 %v2316, %v2543
        %v2606 = vmax.f32 %v2317, %v2531
        %v2607 = vmax.f32 %v2318, %v2519
        %v2608 = vmax.f32 %v2319, %v2507
        %v2609 = vmax.f32 %v2320, %v2567
        %v2610 = vmax.f32 %v2321, %v2556
        %v2611 = vmax.f32 %v2322, %v2544
        %v2612 = vmax.f32 %v2323, %v2532
        %v2613 = vmax.f32 %v2324, %v2520
        %v2614 = vmax.f32 %v2325, %v2508
        %v2615 = vmax.f32 %v2326, %v2568
        %v2616 = vmax.f32 %v2327, %v2557
        %v2617 = vmax.f32 %v2328, %v2545
        %v2618 = vmax.f32 %v2329, %v2533
        %v2619 = vmax.f32 %v2330, %v2521
        %v2620 = vmax.f32 %v2331, %v2509
        %v2621 = vmax.f32 %v2332, %v2569
        %v2622 = vmax.f32 %v2333, %v2558
        %v2623 = vmax.f32 %v2334, %v2546
        %v2624 = vmax.f32 %v2335, %v2534
        %v2625 = vmax.f32 %v2336, %v2522
        %v2626 = vmax.f32 %v2337, %v2510
        %v2627 = vmax.f32 %v2338, %v2570
        %v2628 = vmax.f32 %v2339, %v2559
        %v2629 = vmax.f32 %v2340, %v2547
        %v2630 = vmax.f32 %v2341, %v2535
        %v2631 = vmax.f32 %v2342, %v2523
        %v2632 = vmax.f32 %v2343, %v2511
        %v2633 = vmax.f32 %v2344, %v2571
        %v2634 = vmax.f32 %v2345, %v2560
        %v2635 = vmax.f32 %v2346, %v2548
        %v2636 = vmax.f32 %v2347, %v2536
        %v2637 = vmax.f32 %v2348, %v2524
        %v2638 = vmax.f32 %v2349, %v2512
        %v2639 = vmax.f32 %v2350, %v2572
        %v2640 = vmax.f32 %v2351, %v2561
        %v2641 = vmax.f32 %v2352, %v2549
        %v2642 = vmax.f32 %v2353, %v2537
        %v2643 = vmax.f32 %v2354, %v2525
        %v2644 = vmax.f32 %v2355, %v2513
        %v2645 = vmax.f32 %v2356, %v2573
        %v2646 = vld [vmem:[#allocation7] sm:$0xff]
        %v2647 = vld [vmem:[#allocation7 + $0x8] sm:$0xff]
        %v2648 = vld [vmem:[#allocation7 + $0x10] sm:$0xff]
        %v2649 = vld [vmem:[#allocation7 + $0x18] sm:$0xff]
        %v2650 = vld [vmem:[#allocation7 + $0x20] sm:$0xff]
        %v2651 = vld [vmem:[#allocation7 + $0x28] sm:$0xff]
        %v2652 = vld [vmem:[#allocation7 + $0x30] sm:$0xff]
        %v2653 = vld [vmem:[#allocation7 + $0x38] sm:$0xff]
        %v2654 = vld [vmem:[#allocation7 + $0x40] sm:$0xff]
        %v2655 = vld [vmem:[#allocation7 + $0x48] sm:$0xff]
        %v2656 = vld [vmem:[#allocation7 + $0x50] sm:$0xff]
        %v2657 = vld [vmem:[#allocation7 + $0x58] sm:$0xff]
        %v2658 = vld [vmem:[#allocation7 + $0x60] sm:$0xff]
        %v2659 = vld [vmem:[#allocation7 + $0x68] sm:$0xff]
        %v2660 = vld [vmem:[#allocation7 + $0x70] sm:$0xff]
        %v2661 = vld [vmem:[#allocation7 + $0x78] sm:$0xff]
        %v2662 = vld [vmem:[#allocation7 + $0x80] sm:$0xff]
        %v2663 = vld [vmem:[#allocation7 + $0x88] sm:$0xff]
        %v2664 = vld [vmem:[#allocation7 + $0x90] sm:$0xff]
        %v2665 = vld [vmem:[#allocation7 + $0x98] sm:$0xff]
        %v2666 = vld [vmem:[#allocation7 + $0xa0] sm:$0xff]
        %v2667 = vld [vmem:[#allocation7 + $0xa8] sm:$0xff]
        %v2668 = vld [vmem:[#allocation7 + $0xb0] sm:$0xff]
        %v2669 = vld [vmem:[#allocation7 + $0xb8] sm:$0xff]
        %v2670 = vld [vmem:[#allocation7 + $0xc0] sm:$0xff]
        %v2671 = vld [vmem:[#allocation7 + $0xc8] sm:$0xff]
        %v2672 = vld [vmem:[#allocation7 + $0xd0] sm:$0xff]
        %v2673 = vld [vmem:[#allocation7 + $0xd8] sm:$0xff]
        %v2674 = vld [vmem:[#allocation7 + $0xe0] sm:$0xff]
        %v2675 = vld [vmem:[#allocation7 + $0xe8] sm:$0xff]
        %v2676 = vld [vmem:[#allocation7 + $0xf0] sm:$0xff]
        %v2677 = vld [vmem:[#allocation7 + $0xf8] sm:$0xff]
        %v2678 = vld [vmem:[#allocation7 + $0x100] sm:$0xff]
        %v2679 = vld [vmem:[#allocation7 + $0x108] sm:$0xff]
        %v2680 = vld [vmem:[#allocation7 + $0x110] sm:$0xff]
        %v2681 = vld [vmem:[#allocation7 + $0x118] sm:$0xff]
        %v2682 = vld [vmem:[#allocation7 + $0x120] sm:$0xff]
        %v2683 = vld [vmem:[#allocation7 + $0x128] sm:$0xff]
        %v2684 = vld [vmem:[#allocation7 + $0x130] sm:$0xff]
        %v2685 = vld [vmem:[#allocation7 + $0x138] sm:$0xff]
        %v2686 = vld [vmem:[#allocation7 + $0x140] sm:$0xff]
        %v2687 = vld [vmem:[#allocation7 + $0x148] sm:$0xff]
        %v2688 = vld [vmem:[#allocation7 + $0x150] sm:$0xff]
        %v2689 = vld [vmem:[#allocation7 + $0x158] sm:$0xff]
        %v2690 = vld [vmem:[#allocation7 + $0x160] sm:$0xff]
        %v2691 = vld [vmem:[#allocation7 + $0x168] sm:$0xff]
        %v2692 = vld [vmem:[#allocation7 + $0x170] sm:$0xff]
        %v2693 = vld [vmem:[#allocation7 + $0x178] sm:$0xff]
        %v2694 = vld [vmem:[#allocation7 + $0x180] sm:$0xff]
        %v2695 = vld [vmem:[#allocation7 + $0x188] sm:$0xff]
        %v2696 = vld [vmem:[#allocation7 + $0x190] sm:$0xff]
        %v2697 = vld [vmem:[#allocation7 + $0x198] sm:$0xff]
        %v2698 = vld [vmem:[#allocation7 + $0x1a0] sm:$0xff]
        %v2699 = vld [vmem:[#allocation7 + $0x1a8] sm:$0xff]
        %v2700 = vld [vmem:[#allocation7 + $0x1b0] sm:$0xff]
        %v2701 = vld [vmem:[#allocation7 + $0x1b8] sm:$0xff]
        %v2702 = vld [vmem:[#allocation7 + $0x1c0] sm:$0xff]
        %v2703 = vld [vmem:[#allocation7 + $0x1c8] sm:$0xff]
        %v2704 = vld [vmem:[#allocation7 + $0x1d0] sm:$0xff]
        %v2705 = vld [vmem:[#allocation7 + $0x1d8] sm:$0xff]
        %v2706 = vld [vmem:[#allocation7 + $0x1e0] sm:$0xff]
        %v2707 = vld [vmem:[#allocation7 + $0x1e8] sm:$0xff]
        %v2708 = vld [vmem:[#allocation7 + $0x1f0] sm:$0xff]
        %v2709 = vld [vmem:[#allocation7 + $0x1f8] sm:$0xff]
        %v2710 = vld [vmem:[#allocation7 + $0x200] sm:$0xff]
        %v2711 = vld [vmem:[#allocation7 + $0x208] sm:$0xff]
        %v2712 = vld [vmem:[#allocation7 + $0x210] sm:$0xff]
        %v2713 = vld [vmem:[#allocation7 + $0x218] sm:$0xff]
        %v2714 = vld [vmem:[#allocation7 + $0x220] sm:$0xff]
        %v2715 = vld [vmem:[#allocation7 + $0x228] sm:$0xff]
        %v2716 = vld [vmem:[#allocation7 + $0x230] sm:$0xff]
        %v2717 = vld [vmem:[#allocation7 + $0x238] sm:$0xff]
        %v2718 = vld [vmem:[#allocation7 + $0x240] sm:$0xff]
        %v2719 = vld [vmem:[#allocation7 + $0x248] sm:$0xff]
        %v2720 = vld [vmem:[#allocation7 + $0x250] sm:$0xff]
        %v2721 = vld [vmem:[#allocation7 + $0x258] sm:$0xff]
        %v2722 = vld [vmem:[#allocation7 + $0x260] sm:$0xff]
        %v2723 = vld [vmem:[#allocation7 + $0x268] sm:$0xff]
        %v2724 = vld [vmem:[#allocation7 + $0x270] sm:$0xff]
        %v2725 = vld [vmem:[#allocation7 + $0x278] sm:$0xff]
        %v2726 = vld [vmem:[#allocation7 + $0x280] sm:$0xff]
        %v2727 = vld [vmem:[#allocation7 + $0x288] sm:$0xff]
        %v2728 = vld [vmem:[#allocation7 + $0x290] sm:$0xff]
        %v2729 = vld [vmem:[#allocation7 + $0x298] sm:$0xff]
        %v2730 = vld [vmem:[#allocation7 + $0x2a0] sm:$0xff]
        %v2731 = vld [vmem:[#allocation7 + $0x2a8] sm:$0xff]
        %v2732 = vld [vmem:[#allocation7 + $0x2b0] sm:$0xff]
        %v2733 = vld [vmem:[#allocation7 + $0x2b8] sm:$0xff]
        %v2734 = vld [vmem:[#allocation7 + $0x2c0] sm:$0xff]
        %v2735 = vld [vmem:[#allocation7 + $0x2c8] sm:$0xff]
        %v2736 = vld [vmem:[#allocation7 + $0x2d0] sm:$0xff]
        %v2737 = vld [vmem:[#allocation7 + $0x2d8] sm:$0xff]
        %v2738 = vld [vmem:[#allocation7 + $0x2e0] sm:$0xff]
        %v2739 = vld [vmem:[#allocation7 + $0x2e8] sm:$0xff]
        %v2740 = vld [vmem:[#allocation7 + $0x2f0] sm:$0xff]
        %v2741 = vld [vmem:[#allocation7 + $0x2f8] sm:$0xff]
        %2742 = vmatprep.subr.mxu0 0.0
        %2743 = vmatpush1.msra.mxu0 %v2661
        %2744 = vmatprep.subr.mxu0 0.0
        %2745 = vmatpush1.msra.mxu0 %v2660
        %2746 = vmatprep.subr.mxu0 0.0
        %2747 = vmatpush1.msra.mxu0 %v2659
        %2748 = vmatprep.subr.mxu0 0.0
        %2749 = vmatpush1.msra.mxu0 %v2658
        %2750 = vmatprep.subr.mxu0 0.0
        %2751 = vmatpush1.msra.mxu0 %v2657
        %2752 = vmatprep.subr.mxu0 0.0
        %2753 = vmatpush1.msra.mxu0 %v2656
        %2754 = vmatprep.subr.mxu0 0.0
        %2755 = vmatpush1.msra.mxu0 %v2655
        %2756 = vmatprep.subr.mxu0 0.0
        %2757 = vmatpush1.msra.mxu0 %v2654
        %2758 = vmatprep.subr.mxu0 0.0
        %2759 = vmatpush1.msra.mxu0 %v2653
        %2760 = vmatprep.subr.mxu0 0.0
        %2761 = vmatpush1.msra.mxu0 %v2652
        %2762 = vmatprep.subr.mxu0 0.0
        %2763 = vmatpush1.msra.mxu0 %v2651
        %2764 = vmatprep.subr.mxu0 0.0
        %2765 = vmatpush1.msra.mxu0 %v2650
        %2766 = vmatprep.subr.mxu0 0.0
        %2767 = vmatpush1.msra.mxu0 %v2649
        %2768 = vmatprep.subr.mxu0 0.0
        %2769 = vmatpush1.msra.mxu0 %v2648
        %2770 = vmatprep.subr.mxu0 0.0
        %2771 = vmatpush1.msra.mxu0 %v2647
        %2772 = vmatprep.subr.mxu0 0.0
        %2773 = vmatpush1.msra.mxu0 %v2646
        %2774 = vmatprep.subr.mxu0 0.0
        %2775 = vmatpush2.msra.mxu0 %v2677
        %2776 = vmatprep.subr.mxu0 0.0
        %2777 = vmatpush2.msra.mxu0 %v2676
        %2778 = vmatprep.subr.mxu0 0.0
        %2779 = vmatpush2.msra.mxu0 %v2675
        %2780 = vmatprep.subr.mxu0 0.0
        %2781 = vmatpush2.msra.mxu0 %v2674
        %2782 = vmatprep.subr.mxu0 0.0
        %2783 = vmatpush2.msra.mxu0 %v2673
        %2784 = vmatprep.subr.mxu0 0.0
        %2785 = vmatpush2.msra.mxu0 %v2672
        %2786 = vmatprep.subr.mxu0 0.0
        %2787 = vmatpush2.msra.mxu0 %v2671
        %2788 = vmatprep.subr.mxu0 0.0
        %2789 = vmatpush2.msra.mxu0 %v2670
        %2790 = vmatprep.subr.mxu0 0.0
        %2791 = vmatpush2.msra.mxu0 %v2669
        %2792 = vmatprep.subr.mxu0 0.0
        %2793 = vmatpush2.msra.mxu0 %v2668
        %2794 = vmatprep.subr.mxu0 0.0
        %2795 = vmatpush2.msra.mxu0 %v2667
        %2796 = vmatprep.subr.mxu0 0.0
        %2797 = vmatpush2.msra.mxu0 %v2666
        %2798 = vmatprep.subr.mxu0 0.0
        %2799 = vmatpush2.msra.mxu0 %v2665
        %2800 = vmatprep.subr.mxu0 0.0
        %2801 = vmatpush2.msra.mxu0 %v2664
        %2802 = vmatprep.subr.mxu0 0.0
        %2803 = vmatpush2.msra.mxu0 %v2663
        %2804 = vmatprep.subr.mxu0 0.0
        %2805 = vmatpush2.msra.mxu0 %v2662
        %2806 = vmatprep.mubr.f32.mxu0 %v2575
        %2807 = vmatmul.mubr.f32.gmra.mxu0 %v2574
        %v2808 = vpop.f32.mrf.mxu0
        %v2809 = vadd.f32 0.0, %v2808
        %v2810 = vpop.f32.mrf.mxu0
        %2811 = vmatprep.mubr.f32.mxu0 %v2581
        %2812 = vmatmul.mubr.f32.gmra.mxu0 %v2580
        %v2813 = vpop.f32.mrf.mxu0
        %v2814 = vadd.f32 0.0, %v2813
        %v2815 = vpop.f32.mrf.mxu0
        %2816 = vmatprep.mubr.f32.mxu0 %v2587
        %2817 = vmatmul.mubr.f32.gmra.mxu0 %v2586
        %v2818 = vpop.f32.mrf.mxu0
        %v2819 = vadd.f32 0.0, %v2818
        %v2820 = vpop.f32.mrf.mxu0
        %2821 = vmatprep.mubr.f32.mxu0 %v2593
        %2822 = vmatmul.mubr.f32.gmra.mxu0 %v2592
        %v2823 = vpop.f32.mrf.mxu0
        %v2824 = vadd.f32 0.0, %v2823
        %v2825 = vpop.f32.mrf.mxu0
        %2826 = vmatprep.mubr.f32.mxu0 %v2599
        %2827 = vmatmul.mubr.f32.gmra.mxu0 %v2598
        %v2828 = vpop.f32.mrf.mxu0
        %v2829 = vadd.f32 0.0, %v2828
        %v2830 = vpop.f32.mrf.mxu0
        %2831 = vmatprep.mubr.f32.mxu0 %v2605
        %2832 = vmatmul.mubr.f32.gmra.mxu0 %v2604
        %v2833 = vpop.f32.mrf.mxu0
        %v2834 = vadd.f32 0.0, %v2833
        %v2835 = vpop.f32.mrf.mxu0
        %2836 = vmatprep.mubr.f32.mxu0 %v2611
        %2837 = vmatmul.mubr.f32.gmra.mxu0 %v2610
        %v2838 = vpop.f32.mrf.mxu0
        %v2839 = vadd.f32 0.0, %v2838
        %v2840 = vpop.f32.mrf.mxu0
        %2841 = vmatprep.mubr.f32.mxu0 %v2617
        %2842 = vmatmul.mubr.f32.gmra.mxu0 %v2616
        %v2843 = vpop.f32.mrf.mxu0
        %v2844 = vadd.f32 0.0, %v2843
        %v2845 = vpop.f32.mrf.mxu0
        %2846 = vmatprep.mubr.f32.mxu0 %v2623
        %2847 = vmatmul.mubr.f32.gmra.mxu0 %v2622
        %v2848 = vpop.f32.mrf.mxu0
        %v2849 = vadd.f32 0.0, %v2848
        %v2850 = vpop.f32.mrf.mxu0
        %2851 = vmatprep.mubr.f32.mxu0 %v2629
        %2852 = vmatmul.mubr.f32.gmra.mxu0 %v2628
        %v2853 = vpop.f32.mrf.mxu0
        %v2854 = vadd.f32 0.0, %v2853
        %v2855 = vpop.f32.mrf.mxu0
        %2856 = vmatprep.mubr.f32.mxu0 %v2635
        %2857 = vmatmul.mubr.f32.gmra.mxu0 %v2634
        %v2858 = vpop.f32.mrf.mxu0
        %v2859 = vadd.f32 0.0, %v2858
        %v2860 = vpop.f32.mrf.mxu0
        %2861 = vmatprep.mubr.f32.mxu0 %v2641
        %2862 = vmatmul.mubr.f32.gmra.mxu0 %v2640
        %v2863 = vpop.f32.mrf.mxu0
        %v2864 = vadd.f32 0.0, %v2863
        %v2865 = vpop.f32.mrf.mxu0
        %2866 = vdwg.mxu0
        %2867 = vmatprep.subr.mxu0 0.0
        %2868 = vmatpush1.msra.mxu0 %v2693
        %2869 = vmatprep.subr.mxu0 0.0
        %2870 = vmatpush1.msra.mxu0 %v2692
        %2871 = vmatprep.subr.mxu0 0.0
        %2872 = vmatpush1.msra.mxu0 %v2691
        %2873 = vmatprep.subr.mxu0 0.0
        %2874 = vmatpush1.msra.mxu0 %v2690
        %2875 = vmatprep.subr.mxu0 0.0
        %2876 = vmatpush1.msra.mxu0 %v2689
        %2877 = vmatprep.subr.mxu0 0.0
        %2878 = vmatpush1.msra.mxu0 %v2688
        %2879 = vmatprep.subr.mxu0 0.0
        %2880 = vmatpush1.msra.mxu0 %v2687
        %2881 = vmatprep.subr.mxu0 0.0
        %2882 = vmatpush1.msra.mxu0 %v2686
        %2883 = vmatprep.subr.mxu0 0.0
        %2884 = vmatpush1.msra.mxu0 %v2685
        %2885 = vmatprep.subr.mxu0 0.0
        %2886 = vmatpush1.msra.mxu0 %v2684
        %2887 = vmatprep.subr.mxu0 0.0
        %2888 = vmatpush1.msra.mxu0 %v2683
        %2889 = vmatprep.subr.mxu0 0.0
        %2890 = vmatpush1.msra.mxu0 %v2682
        %2891 = vmatprep.subr.mxu0 0.0
        %2892 = vmatpush1.msra.mxu0 %v2681
        %2893 = vmatprep.subr.mxu0 0.0
        %2894 = vmatpush1.msra.mxu0 %v2680
        %2895 = vmatprep.subr.mxu0 0.0
        %2896 = vmatpush1.msra.mxu0 %v2679
        %2897 = vmatprep.subr.mxu0 0.0
        %2898 = vmatpush1.msra.mxu0 %v2678
        %2899 = vmatprep.subr.mxu0 0.0
        %2900 = vmatpush2.msra.mxu0 %v2709
        %2901 = vmatprep.subr.mxu0 0.0
        %2902 = vmatpush2.msra.mxu0 %v2708
        %2903 = vmatprep.subr.mxu0 0.0
        %2904 = vmatpush2.msra.mxu0 %v2707
        %2905 = vmatprep.subr.mxu0 0.0
        %2906 = vmatpush2.msra.mxu0 %v2706
        %2907 = vmatprep.subr.mxu0 0.0
        %2908 = vmatpush2.msra.mxu0 %v2705
        %2909 = vmatprep.subr.mxu0 0.0
        %2910 = vmatpush2.msra.mxu0 %v2704
        %2911 = vmatprep.subr.mxu0 0.0
        %2912 = vmatpush2.msra.mxu0 %v2703
        %2913 = vmatprep.subr.mxu0 0.0
        %2914 = vmatpush2.msra.mxu0 %v2702
        %2915 = vmatprep.subr.mxu0 0.0
        %2916 = vmatpush2.msra.mxu0 %v2701
        %2917 = vmatprep.subr.mxu0 0.0
        %2918 = vmatpush2.msra.mxu0 %v2700
        %2919 = vmatprep.subr.mxu0 0.0
        %2920 = vmatpush2.msra.mxu0 %v2699
        %2921 = vmatprep.subr.mxu0 0.0
        %2922 = vmatpush2.msra.mxu0 %v2698
        %2923 = vmatprep.subr.mxu0 0.0
        %2924 = vmatpush2.msra.mxu0 %v2697
        %2925 = vmatprep.subr.mxu0 0.0
        %2926 = vmatpush2.msra.mxu0 %v2696
        %2927 = vmatprep.subr.mxu0 0.0
        %2928 = vmatpush2.msra.mxu0 %v2695
        %2929 = vmatprep.subr.mxu0 0.0
        %2930 = vmatpush2.msra.mxu0 %v2694
        %2931 = vmatprep.mubr.f32.mxu0 %v2577
        %2932 = vmatmul.mubr.f32.gmra.mxu0 %v2576
        %v2933 = vpop.f32.mrf.mxu0
        %v2934 = vadd.f32 %v2809, %v2933
        %v2935 = vpop.f32.mrf.mxu0
        %2936 = vmatprep.mubr.f32.mxu0 %v2583
        %2937 = vmatmul.mubr.f32.gmra.mxu0 %v2582
        %v2938 = vpop.f32.mrf.mxu0
        %v2939 = vadd.f32 %v2814, %v2938
        %v2940 = vpop.f32.mrf.mxu0
        %2941 = vmatprep.mubr.f32.mxu0 %v2589
        %2942 = vmatmul.mubr.f32.gmra.mxu0 %v2588
        %v2943 = vpop.f32.mrf.mxu0
        %v2944 = vadd.f32 %v2819, %v2943
        %v2945 = vpop.f32.mrf.mxu0
        %2946 = vmatprep.mubr.f32.mxu0 %v2595
        %2947 = vmatmul.mubr.f32.gmra.mxu0 %v2594
        %v2948 = vpop.f32.mrf.mxu0
        %v2949 = vadd.f32 %v2824, %v2948
        %v2950 = vpop.f32.mrf.mxu0
        %2951 = vmatprep.mubr.f32.mxu0 %v2601
        %2952 = vmatmul.mubr.f32.gmra.mxu0 %v2600
        %v2953 = vpop.f32.mrf.mxu0
        %v2954 = vadd.f32 %v2829, %v2953
        %v2955 = vpop.f32.mrf.mxu0
        %2956 = vmatprep.mubr.f32.mxu0 %v2607
        %2957 = vmatmul.mubr.f32.gmra.mxu0 %v2606
        %v2958 = vpop.f32.mrf.mxu0
        %v2959 = vadd.f32 %v2834, %v2958
        %v2960 = vpop.f32.mrf.mxu0
        %2961 = vmatprep.mubr.f32.mxu0 %v2613
        %2962 = vmatmul.mubr.f32.gmra.mxu0 %v2612
        %v2963 = vpop.f32.mrf.mxu0
        %v2964 = vadd.f32 %v2839, %v2963
        %v2965 = vpop.f32.mrf.mxu0
        %2966 = vmatprep.mubr.f32.mxu0 %v2619
        %2967 = vmatmul.mubr.f32.gmra.mxu0 %v2618
        %v2968 = vpop.f32.mrf.mxu0
        %v2969 = vadd.f32 %v2844, %v2968
        %v2970 = vpop.f32.mrf.mxu0
        %2971 = vmatprep.mubr.f32.mxu0 %v2625
        %2972 = vmatmul.mubr.f32.gmra.mxu0 %v2624
        %v2973 = vpop.f32.mrf.mxu0
        %v2974 = vadd.f32 %v2849, %v2973
        %v2975 = vpop.f32.mrf.mxu0
        %2976 = vmatprep.mubr.f32.mxu0 %v2631
        %2977 = vmatmul.mubr.f32.gmra.mxu0 %v2630
        %v2978 = vpop.f32.mrf.mxu0
        %v2979 = vadd.f32 %v2854, %v2978
        %v2980 = vpop.f32.mrf.mxu0
        %2981 = vmatprep.mubr.f32.mxu0 %v2637
        %2982 = vmatmul.mubr.f32.gmra.mxu0 %v2636
        %v2983 = vpop.f32.mrf.mxu0
        %v2984 = vadd.f32 %v2859, %v2983
        %v2985 = vpop.f32.mrf.mxu0
        %2986 = vmatprep.mubr.f32.mxu0 %v2643
        %2987 = vmatmul.mubr.f32.gmra.mxu0 %v2642
        %v2988 = vpop.f32.mrf.mxu0
        %v2989 = vadd.f32 %v2864, %v2988
        %v2990 = vpop.f32.mrf.mxu0
        %2991 = vdwg.mxu0
        %2992 = vmatprep.subr.mxu0 0.0
        %2993 = vmatpush1.msra.mxu0 %v2725
        %2994 = vmatprep.subr.mxu0 0.0
        %2995 = vmatpush1.msra.mxu0 %v2724
        %2996 = vmatprep.subr.mxu0 0.0
        %2997 = vmatpush1.msra.mxu0 %v2723
        %2998 = vmatprep.subr.mxu0 0.0
        %2999 = vmatpush1.msra.mxu0 %v2722
        %3000 = vmatprep.subr.mxu0 0.0
        %3001 = vmatpush1.msra.mxu0 %v2721
        %3002 = vmatprep.subr.mxu0 0.0
        %3003 = vmatpush1.msra.mxu0 %v2720
        %3004 = vmatprep.subr.mxu0 0.0
        %3005 = vmatpush1.msra.mxu0 %v2719
        %3006 = vmatprep.subr.mxu0 0.0
        %3007 = vmatpush1.msra.mxu0 %v2718
        %3008 = vmatprep.subr.mxu0 0.0
        %3009 = vmatpush1.msra.mxu0 %v2717
        %3010 = vmatprep.subr.mxu0 0.0
        %3011 = vmatpush1.msra.mxu0 %v2716
        %3012 = vmatprep.subr.mxu0 0.0
        %3013 = vmatpush1.msra.mxu0 %v2715
        %3014 = vmatprep.subr.mxu0 0.0
        %3015 = vmatpush1.msra.mxu0 %v2714
        %3016 = vmatprep.subr.mxu0 0.0
        %3017 = vmatpush1.msra.mxu0 %v2713
        %3018 = vmatprep.subr.mxu0 0.0
        %3019 = vmatpush1.msra.mxu0 %v2712
        %3020 = vmatprep.subr.mxu0 0.0
        %3021 = vmatpush1.msra.mxu0 %v2711
        %3022 = vmatprep.subr.mxu0 0.0
        %3023 = vmatpush1.msra.mxu0 %v2710
        %3024 = vmatprep.subr.mxu0 0.0
        %3025 = vmatpush2.msra.mxu0 %v2741
        %3026 = vmatprep.subr.mxu0 0.0
        %3027 = vmatpush2.msra.mxu0 %v2740
        %3028 = vmatprep.subr.mxu0 0.0
        %3029 = vmatpush2.msra.mxu0 %v2739
        %3030 = vmatprep.subr.mxu0 0.0
        %3031 = vmatpush2.msra.mxu0 %v2738
        %3032 = vmatprep.subr.mxu0 0.0
        %3033 = vmatpush2.msra.mxu0 %v2737
        %3034 = vmatprep.subr.mxu0 0.0
        %3035 = vmatpush2.msra.mxu0 %v2736
        %3036 = vmatprep.subr.mxu0 0.0
        %3037 = vmatpush2.msra.mxu0 %v2735
        %3038 = vmatprep.subr.mxu0 0.0
        %3039 = vmatpush2.msra.mxu0 %v2734
        %3040 = vmatprep.subr.mxu0 0.0
        %3041 = vmatpush2.msra.mxu0 %v2733
        %3042 = vmatprep.subr.mxu0 0.0
        %3043 = vmatpush2.msra.mxu0 %v2732
        %3044 = vmatprep.subr.mxu0 0.0
        %3045 = vmatpush2.msra.mxu0 %v2731
        %3046 = vmatprep.subr.mxu0 0.0
        %3047 = vmatpush2.msra.mxu0 %v2730
        %3048 = vmatprep.subr.mxu0 0.0
        %3049 = vmatpush2.msra.mxu0 %v2729
        %3050 = vmatprep.subr.mxu0 0.0
        %3051 = vmatpush2.msra.mxu0 %v2728
        %3052 = vmatprep.subr.mxu0 0.0
        %3053 = vmatpush2.msra.mxu0 %v2727
        %3054 = vmatprep.subr.mxu0 0.0
        %3055 = vmatpush2.msra.mxu0 %v2726
        %3056 = vmatprep.mubr.f32.mxu0 %v2579
        %3057 = vmatmul.mubr.f32.gmra.mxu0 %v2578
        %v3058 = vpop.f32.mrf.mxu0
        %v3059 = vadd.f32 %v2934, %v3058
        %v3060 = vpop.f32.mrf.mxu0
        %3061 = vmatprep.mubr.f32.mxu0 %v2585
        %3062 = vmatmul.mubr.f32.gmra.mxu0 %v2584
        %v3063 = vpop.f32.mrf.mxu0
        %v3064 = vadd.f32 %v2939, %v3063
        %v3065 = vpop.f32.mrf.mxu0
        %3066 = vmatprep.mubr.f32.mxu0 %v2591
        %3067 = vmatmul.mubr.f32.gmra.mxu0 %v2590
        %v3068 = vpop.f32.mrf.mxu0
        %v3069 = vadd.f32 %v2944, %v3068
        %v3070 = vpop.f32.mrf.mxu0
        %3071 = vmatprep.mubr.f32.mxu0 %v2597
        %3072 = vmatmul.mubr.f32.gmra.mxu0 %v2596
        %v3073 = vpop.f32.mrf.mxu0
        %v3074 = vadd.f32 %v2949, %v3073
        %v3075 = vpop.f32.mrf.mxu0
        %3076 = vmatprep.mubr.f32.mxu0 %v2603
        %3077 = vmatmul.mubr.f32.gmra.mxu0 %v2602
        %v3078 = vpop.f32.mrf.mxu0
        %v3079 = vadd.f32 %v2954, %v3078
        %v3080 = vpop.f32.mrf.mxu0
        %3081 = vmatprep.mubr.f32.mxu0 %v2609
        %3082 = vmatmul.mubr.f32.gmra.mxu0 %v2608
        %v3083 = vpop.f32.mrf.mxu0
        %v3084 = vadd.f32 %v2959, %v3083
        %v3085 = vpop.f32.mrf.mxu0
        %3086 = vmatprep.mubr.f32.mxu0 %v2615
        %3087 = vmatmul.mubr.f32.gmra.mxu0 %v2614
        %v3088 = vpop.f32.mrf.mxu0
        %v3089 = vadd.f32 %v2964, %v3088
        %v3090 = vpop.f32.mrf.mxu0
        %3091 = vmatprep.mubr.f32.mxu0 %v2621
        %3092 = vmatmul.mubr.f32.gmra.mxu0 %v2620
        %v3093 = vpop.f32.mrf.mxu0
        %v3094 = vadd.f32 %v2969, %v3093
        %v3095 = vpop.f32.mrf.mxu0
        %3096 = vmatprep.mubr.f32.mxu0 %v2627
        %3097 = vmatmul.mubr.f32.gmra.mxu0 %v2626
        %v3098 = vpop.f32.mrf.mxu0
        %v3099 = vadd.f32 %v2974, %v3098
        %v3100 = vpop.f32.mrf.mxu0
        %3101 = vmatprep.mubr.f32.mxu0 %v2633
        %3102 = vmatmul.mubr.f32.gmra.mxu0 %v2632
        %v3103 = vpop.f32.mrf.mxu0
        %v3104 = vadd.f32 %v2979, %v3103
        %v3105 = vpop.f32.mrf.mxu0
        %3106 = vmatprep.mubr.f32.mxu0 %v2639
        %3107 = vmatmul.mubr.f32.gmra.mxu0 %v2638
        %v3108 = vpop.f32.mrf.mxu0
        %v3109 = vadd.f32 %v2984, %v3108
        %v3110 = vpop.f32.mrf.mxu0
        %3111 = vmatprep.mubr.f32.mxu0 %v2645
        %3112 = vmatmul.mubr.f32.gmra.mxu0 %v2644
        %v3113 = vpop.f32.mrf.mxu0
        %v3114 = vadd.f32 %v2989, %v3113
        %v3115 = vpop.f32.mrf.mxu0
        %3116 = vdwg.mxu0
        %3117 = vst [vmem:[%s217] sm:$0xff] %v3059
        %3118 = vst [vmem:[%s217 + $0x8] sm:$0xff] %v3064
        %3119 = vst [vmem:[%s217 + $0x10] sm:$0xff] %v3069
        %3120 = vst [vmem:[%s217 + $0x18] sm:$0xff] %v3074
        %3121 = vst [vmem:[%s217 + $0x20] sm:$0xff] %v3079
        %3122 = vst [vmem:[%s217 + $0x28] sm:$0xff] %v3084
        %3123 = vst [vmem:[%s217 + $0x30] sm:$0xff] %v3089
        %3124 = vst [vmem:[%s217 + $0x38] sm:$0xff] %v3094
        %3125 = vst [vmem:[%s217 + $0x40] sm:$0xff] %v3099
        %3126 = vst [vmem:[%s217 + $0x48] sm:$0xff] %v3104
        %3127 = vst [vmem:[%s217 + $0x50] sm:$0xff] %v3109
        %3128 = vst [vmem:[%s217 + $0x58] sm:$0x1f] %v3114
        %s3129 = sand.u32 %s97, 1
        %s3130 = scalar_lea.sflag [#allocation4], %s3129
        %s3131 = sand.u32 %s97, 1
        %s3132 = smul.addr %s3131, 96
        %s3133 = scalar_lea.vmem [#allocation8], %s3132
        // Predicated region
        $region45: #{tpu_custom_call.1} parent=31 // pred_check
          %p3134 = pneg %p107
        $region46: #{tpu_custom_call.1} parent=31 // pred_check_branch
          %3136 = sbr.rel (%p3134) target = $region48
        $region47: #{tpu_custom_call.1} parent=31 // pred_region
          %s3138 = ssub.s32 1536, 1536
          %3139 = vsyncadd %s3130, %s3138
          %s3140 = smul.addr %s21, 128
          %s3141 = scalar_lea.hbm %s3, %s3140
          %s3142 = sshll.u32 %s3133, 4
          %s3143 = int_to_ptr.vmem [resolvable:$true] %s3142
          %3148 = dma.vmem_to_hbm [thread:$0]  %s3143, 1536, %s3141, %s3130, 128, 256, 8
        $region48: #{tpu_custom_call.1} parent=31 // pred_fallthru
          _
      $region32: #{tpu_custom_call.1} parent=5 // pred_fallthru
        _
      %p3149 = scmp.le.s32.totalorder 2, %s16
      // Predicated region
      $region49: #{tpu_custom_call.1} parent=5 // pred_check
        %p3150 = pneg %p3149
      $region50: #{tpu_custom_call.1} parent=5 // pred_check_branch
        %3152 = sbr.rel (%p3150) target = $region52
      $region51: #{tpu_custom_call.1} parent=5 // pred_region
        %s3153 = ssub.s32 %s16, 2
        // Predicated region
        $region53: #{tpu_custom_call.1} parent=51 // pred_check
          %p3154 = pneg %p113
        $region54: #{tpu_custom_call.1} parent=51 // pred_check_branch
          %3156 = sbr.rel (%p3154) target = $region56
        $region55: #{tpu_custom_call.1} parent=51 // pred_region
          %s3157 = sand.u32 %s98, 1
          %s3158 = scalar_lea.sflag [#allocation4], %s3157
          %s3159 = sand.u32 %s98, 1
          %s3160 = smul.addr %s3159, 96
          %s3161 = scalar_lea.vmem [#allocation8], %s3160
          %3162 = dma.done %s3158, 1536
        $region56: #{tpu_custom_call.1} parent=51 // pred_fallthru
          _
      $region52: #{tpu_custom_call.1} parent=5 // pred_fallthru
        _
    $region6: #{tpu_custom_call.1} parent=1 // loop_footer
      %s20 = sadd.s32 1, %s16
    $region7: #{tpu_custom_call.1} parent=1 // loop_footer_branch
      %15 = sbr.rel target = $region3
    $region8: #{tpu_custom_call.1} parent=1 // loop_exit
      _
    %3163 = vsyncpa [#allocation3], 1
    %s3164 = scalar_lea.sflag [#allocation3], 1
    %3165 = vsyncpa %s3164, 1
    %3166 = vsyncpa [#allocation6], 1
    %3167 = vsyncpa [#allocation4], 1
    %s3168 = scalar_lea.sflag [#allocation4], 1
    %3169 = vsyncpa %s3168, 1

</llo_original>
